<compile_context>
chip_gen: v6e
topology: v6e:2x2x1
jax: 0.10.0
libtpu: 0.0.40
codegen_flags: <defaults>
</compile_context>

<pallas_src>
import jax
import jax.numpy as jnp
from jax import lax
from jax.experimental import pallas as pl
from jax.experimental.pallas import tpu as pltpu

n_embd = 27
num_heads = 3
head_size = 9  # head_size * num_heads == n_embd


def make_mha_kernel(B, T, H, hs, C):
    """Build a kernel closed over the static problem sizes."""
    scale = 1.0 / (hs ** 0.5)
    Hhs = H * hs
    NEG = -1e30  # large finite negative -> exp() underflows to exactly 0

    def kernel(x_ref, wqkv_ref, wp_ref, bp_ref, o_ref):
        # x_ref:    (B*T, C)       all batches, rows folded together
        # wqkv_ref: (C, 3*H*hs)    fused [Q heads | K heads | V heads] projection
        # wp_ref:   (H, hs, C)     per-head slice of the output projection weight
        # bp_ref:   (1, C)         output projection bias
        # o_ref:    (B*T, C)
        x = x_ref[...]                                                 # (B*T, C)

        # One wide projection matmul for all heads and q/k/v at once.
        qkv = jnp.dot(x, wqkv_ref[...],
                      preferred_element_type=jnp.float32)             # (B*T, 3*H*hs)

        # Additive causal mask, computed once per kernel call.
        row = lax.broadcasted_iota(jnp.int32, (T, T), 0)
        col = lax.broadcasted_iota(jnp.int32, (T, T), 1)
        neg_mask = jnp.where(row >= col, 0.0, NEG).astype(jnp.float32)  # (T, T)

        # Hoisted: bias broadcast (no CSE of broadcast_in_dim inside loops).
        bias_tile = jnp.broadcast_to(bp_ref[...], (T, C)).astype(jnp.float32)

        for b in range(B):                              # B static & tiny -> unrolled
            r0 = b * T                                   # sublane-aligned (T = 8)
            q_b = qkv[r0:r0 + T, 0:Hhs]                  # (T, H*hs)
            k_b = qkv[r0:r0 + T, Hhs:2 * Hhs]            # (T, H*hs)
            v_b = qkv[r0:r0 + T, 2 * Hhs:3 * Hhs]        # (T, H*hs)

            # Accumulate the output projection per head; starts from the bias,
            # so no concatenate of head outputs is ever formed.
            acc = bias_tile

            for h in range(H):                           # H static -> unrolled
                q = q_b[:, h * hs:(h + 1) * hs]          # (T, hs)
                k = k_b[:, h * hs:(h + 1) * hs]          # (T, hs)
                v = v_b[:, h * hs:(h + 1) * hs]          # (T, hs)

                # q @ k^T without an explicit transpose: contract last axes.
                wei = lax.dot_general(
                    q, k, (((1,), (1,)), ((), ())),
                    preferred_element_type=jnp.float32)                # (T, T)
                wei = wei * scale + neg_mask

                # Numerically-stable softmax; reciprocal on the EUP.
                wei = wei - jnp.max(wei, axis=-1, keepdims=True)
                p = jnp.exp(wei)
                denom = jnp.sum(p, axis=-1, keepdims=True)
                p = p * pl.reciprocal(denom, approx=True)              # (T, T)

                att = jnp.dot(p, v,
                              preferred_element_type=jnp.float32)      # (T, hs)
                # Fold this head's contribution straight through the output
                # projection (no lane-axis concat).
                acc = acc + jnp.dot(att, wp_ref[h],
                                    preferred_element_type=jnp.float32)  # (T, C)

            o_ref[r0:r0 + T, :] = acc.astype(o_ref.dtype)

    return kernel


def multi_head_attention(x, wq, wk, wv, wp, bp):
    """x: (B, T, C); wq/wk/wv: (H, hs, C) PyTorch Linear layout (out, in);
    wp: (C, H*hs) PyTorch Linear layout; bp: (C,)."""
    B, T, C = x.shape
    H, hs, _ = wq.shape

    # Glue: fuse per-head q/k/v weights into one (C, 3*H*hs) matrix whose
    # column block [h*hs:(h+1)*hs] (within each q/k/v section) equals w[h].T.
    def to_cols(w):                       # (H, hs, C) -> (C, H*hs)
        return jnp.transpose(w, (2, 0, 1)).reshape(C, H * hs)

    w_qkv = jnp.concatenate([to_cols(wq), to_cols(wk), to_cols(wv)], axis=1)  # (C, 3*H*hs)
    wp_heads = jnp.transpose(wp, (1, 0)).reshape(H, hs, C)                    # (H, hs, C)
    bp2 = bp.reshape(1, C)
    x_flat = x.reshape(B * T, C)

    kernel = make_mha_kernel(B, T, H, hs, C)

    out_flat = pl.pallas_call(
        kernel,
        out_shape=jax.ShapeDtypeStruct((B * T, C), jnp.float32),
        # Single invocation (no grid): whole arrays resident in VMEM.
        in_specs=[
            pl.BlockSpec(memory_space=pltpu.MemorySpace.VMEM),  # x_flat
            pl.BlockSpec(memory_space=pltpu.MemorySpace.VMEM),  # w_qkv
            pl.BlockSpec(memory_space=pltpu.MemorySpace.VMEM),  # wp_heads
            pl.BlockSpec(memory_space=pltpu.MemorySpace.VMEM),  # bp2
        ],
        out_specs=pl.BlockSpec(memory_space=pltpu.MemorySpace.VMEM),
    )(x_flat, w_qkv, wp_heads, bp2)

    return out_flat.reshape(B, T, C)


def reference(x, wq, wk, wv, wp, bp):
    """Pure-JAX reference mirroring the PyTorch forward (eval mode)."""
    B, T, C = x.shape
    H, hs, _ = wq.shape
    outs = []
    causal = jnp.tril(jnp.ones((T, T), dtype=bool))
    for h in range(H):
        q = x @ wq[h].T
        k = x @ wk[h].T
        v = x @ wv[h].T
        wei = (q @ jnp.swapaxes(k, -2, -1)) * (hs ** -0.5)
        wei = jnp.where(causal, wei, -jnp.inf)
        wei = jax.nn.softmax(wei, axis=-1)
        outs.append(wei @ v)
    cat = jnp.concatenate(outs, axis=-1)
    return cat @ wp.T + bp


if __name__ == "__main__":
    B, T = 2, 8
    key = jax.random.PRNGKey(0)
    kx, kq, kk, kv, kp, kb = jax.random.split(key, 6)

    x = jax.random.normal(kx, (B, T, n_embd), dtype=jnp.float32)
    # deterministic synthetic parameters (PyTorch Linear layout: (out, in))
    wq = jax.random.normal(kq, (num_heads, head_size, n_embd), dtype=jnp.float32) * 0.1
    wk = jax.random.normal(kk, (num_heads, head_size, n_embd), dtype=jnp.float32) * 0.1
    wv = jax.random.normal(kv, (num_heads, head_size, n_embd), dtype=jnp.float32) * 0.1
    wp = jax.random.normal(kp, (n_embd, num_heads * head_size), dtype=jnp.float32) * 0.1
    bp = jax.random.normal(kb, (n_embd,), dtype=jnp.float32) * 0.1

    out = multi_head_attention(x, wq, wk, wv, wp, bp)
    out = jax.block_until_ready(out)

    ref = reference(x, wq, wk, wv, wp, bp)
    assert out.shape == (B, T, n_embd)
    # Slightly relaxed tolerance because the softmax denominator uses the
    # approximate EUP reciprocal (pl.reciprocal(..., approx=True)).
    assert jnp.allclose(out, ref, atol=2e-3, rtol=2e-3), "mismatch vs reference"

    print("KERNEL_OK")
</pallas_src>

<mosaic_0001>
module attributes {stable_mosaic.version = 11 : i64} {
  func.func @kernel(%arg0: memref<16x27xf32, #tpu.memory_space<vmem>>, %arg1: memref<27x81xf32, #tpu.memory_space<vmem>>, %arg2: memref<3x9x27xf32, #tpu.memory_space<vmem>>, %arg3: memref<1x27xf32, #tpu.memory_space<vmem>>, %arg4: memref<16x27xf32, #tpu.memory_space<vmem>>) attributes {dimension_semantics = [], scalar_prefetch = 0 : i64, scratch_operands = 0 : i64, tpu.core_type = #tpu.core_type<tc>} {
    %c0 = arith.constant 0 : index
    %c0_0 = arith.constant 0 : index
    %0 = vector.load %arg0[%c0, %c0_0] : memref<16x27xf32, #tpu.memory_space<vmem>>, vector<16x27xf32>
    %c0_1 = arith.constant 0 : index
    %c0_2 = arith.constant 0 : index
    %1 = vector.load %arg1[%c0_1, %c0_2] : memref<27x81xf32, #tpu.memory_space<vmem>>, vector<27x81xf32>
    %cst = arith.constant dense<0.000000e+00> : vector<16x81xf32>
    %2 = tpu.matmul %0, %1, %cst {dimension_numbers = #tpu.dot_dimension_numbers<[1], [0], [0], [1], [0, 0, 1, 1], [], []>} : vector<16x27xf32>, vector<27x81xf32>, vector<16x81xf32> -> vector<16x81xf32>
    %3 = tpu.iota {dimensions = array<i32: 0>} : vector<8x8xi32>
    %4 = tpu.iota {dimensions = array<i32: 1>} : vector<8x8xi32>
    %5 = arith.cmpi sge, %3, %4 : vector<8x8xi32>
    %cst_3 = arith.constant 0.000000e+00 : f32
    %cst_4 = arith.constant -1.000000e+30 : f32
    %6 = vector.broadcast %cst_3 : f32 to vector<8x8xf32>
    %7 = vector.broadcast %cst_4 : f32 to vector<8x8xf32>
    %8 = arith.select %5, %6, %7 : vector<8x8xi1>, vector<8x8xf32>
    %c0_5 = arith.constant 0 : index
    %c0_6 = arith.constant 0 : index
    %9 = vector.load %arg3[%c0_5, %c0_6] : memref<1x27xf32, #tpu.memory_space<vmem>>, vector<1x27xf32>
    %10 = vector.shape_cast %9 : vector<1x27xf32> to vector<1x27xf32>
    %11 = vector.broadcast %10 : vector<1x27xf32> to vector<8x27xf32>
    %12 = vector.extract_strided_slice %2 {offsets = [0, 0], sizes = [8, 27], strides = [1, 1]} : vector<16x81xf32> to vector<8x27xf32>
    %13 = vector.extract_strided_slice %2 {offsets = [0, 27], sizes = [8, 27], strides = [1, 1]} : vector<16x81xf32> to vector<8x27xf32>
    %14 = vector.extract_strided_slice %2 {offsets = [0, 54], sizes = [8, 27], strides = [1, 1]} : vector<16x81xf32> to vector<8x27xf32>
    %15 = vector.extract_strided_slice %12 {offsets = [0, 0], sizes = [8, 9], strides = [1, 1]} : vector<8x27xf32> to vector<8x9xf32>
    %16 = vector.extract_strided_slice %13 {offsets = [0, 0], sizes = [8, 9], strides = [1, 1]} : vector<8x27xf32> to vector<8x9xf32>
    %17 = vector.extract_strided_slice %14 {offsets = [0, 0], sizes = [8, 9], strides = [1, 1]} : vector<8x27xf32> to vector<8x9xf32>
    %cst_7 = arith.constant dense<0.000000e+00> : vector<8x8xf32>
    %18 = tpu.matmul %15, %16, %cst_7 {dimension_numbers = #tpu.dot_dimension_numbers<[1], [1], [0], [0], [0, 0, 1, 0], [], []>} : vector<8x9xf32>, vector<8x9xf32>, vector<8x8xf32> -> vector<8x8xf32>
    %cst_8 = arith.constant 0.333333343 : f32
    %19 = vector.broadcast %cst_8 : f32 to vector<8x8xf32>
    %20 = arith.mulf %18, %19 : vector<8x8xf32>
    %21 = arith.addf %20, %8 : vector<8x8xf32>
    %cst_9 = arith.constant dense<0xFF800000> : vector<8xf32>
    %22 = vector.multi_reduction <maximumf>, %21, %cst_9 [1] : vector<8x8xf32> to vector<8xf32>
    %23 = vector.shape_cast %22 : vector<8xf32> to vector<8x1xf32>
    %24 = vector.broadcast %23 : vector<8x1xf32> to vector<8x8xf32>
    %25 = arith.subf %21, %24 : vector<8x8xf32>
    %26 = math.exp %25 : vector<8x8xf32>
    %cst_10 = arith.constant dense<0.000000e+00> : vector<8xf32>
    %27 = vector.multi_reduction <add>, %26, %cst_10 [1] : vector<8x8xf32> to vector<8xf32>
    %28 = vector.shape_cast %27 : vector<8xf32> to vector<8x1xf32>
    %29 = tpu.reciprocal %28 {approx = true} : vector<8x1xf32> -> vector<8x1xf32>
    %30 = vector.broadcast %29 : vector<8x1xf32> to vector<8x8xf32>
    %31 = arith.mulf %26, %30 : vector<8x8xf32>
    %cst_11 = arith.constant dense<0.000000e+00> : vector<8x9xf32>
    %32 = tpu.matmul %31, %17, %cst_11 {dimension_numbers = #tpu.dot_dimension_numbers<[1], [0], [0], [1], [0, 0, 1, 1], [], []>} : vector<8x8xf32>, vector<8x9xf32>, vector<8x9xf32> -> vector<8x9xf32>
    %c0_12 = arith.constant 0 : index
    %c0_13 = arith.constant 0 : index
    %c0_14 = arith.constant 0 : index
    %33 = vector.load %arg2[%c0_12, %c0_13, %c0_14] : memref<3x9x27xf32, #tpu.memory_space<vmem>>, vector<1x9x27xf32>
    %34 = vector.shape_cast %33 : vector<1x9x27xf32> to vector<9x27xf32>
    %cst_15 = arith.constant dense<0.000000e+00> : vector<8x27xf32>
    %35 = tpu.matmul %32, %34, %cst_15 {dimension_numbers = #tpu.dot_dimension_numbers<[1], [0], [0], [1], [0, 0, 1, 1], [], []>} : vector<8x9xf32>, vector<9x27xf32>, vector<8x27xf32> -> vector<8x27xf32>
    %36 = arith.addf %11, %35 : vector<8x27xf32>
    %37 = vector.extract_strided_slice %12 {offsets = [0, 9], sizes = [8, 9], strides = [1, 1]} : vector<8x27xf32> to vector<8x9xf32>
    %38 = vector.extract_strided_slice %13 {offsets = [0, 9], sizes = [8, 9], strides = [1, 1]} : vector<8x27xf32> to vector<8x9xf32>
    %39 = vector.extract_strided_slice %14 {offsets = [0, 9], sizes = [8, 9], strides = [1, 1]} : vector<8x27xf32> to vector<8x9xf32>
    %cst_16 = arith.constant dense<0.000000e+00> : vector<8x8xf32>
    %40 = tpu.matmul %37, %38, %cst_16 {dimension_numbers = #tpu.dot_dimension_numbers<[1], [1], [0], [0], [0, 0, 1, 0], [], []>} : vector<8x9xf32>, vector<8x9xf32>, vector<8x8xf32> -> vector<8x8xf32>
    %cst_17 = arith.constant 0.333333343 : f32
    %41 = vector.broadcast %cst_17 : f32 to vector<8x8xf32>
    %42 = arith.mulf %40, %41 : vector<8x8xf32>
    %43 = arith.addf %42, %8 : vector<8x8xf32>
    %cst_18 = arith.constant dense<0xFF800000> : vector<8xf32>
    %44 = vector.multi_reduction <maximumf>, %43, %cst_18 [1] : vector<8x8xf32> to vector<8xf32>
    %45 = vector.shape_cast %44 : vector<8xf32> to vector<8x1xf32>
    %46 = vector.broadcast %45 : vector<8x1xf32> to vector<8x8xf32>
    %47 = arith.subf %43, %46 : vector<8x8xf32>
    %48 = math.exp %47 : vector<8x8xf32>
    %cst_19 = arith.constant dense<0.000000e+00> : vector<8xf32>
    %49 = vector.multi_reduction <add>, %48, %cst_19 [1] : vector<8x8xf32> to vector<8xf32>
    %50 = vector.shape_cast %49 : vector<8xf32> to vector<8x1xf32>
    %51 = tpu.reciprocal %50 {approx = true} : vector<8x1xf32> -> vector<8x1xf32>
    %52 = vector.broadcast %51 : vector<8x1xf32> to vector<8x8xf32>
    %53 = arith.mulf %48, %52 : vector<8x8xf32>
    %cst_20 = arith.constant dense<0.000000e+00> : vector<8x9xf32>
    %54 = tpu.matmul %53, %39, %cst_20 {dimension_numbers = #tpu.dot_dimension_numbers<[1], [0], [0], [1], [0, 0, 1, 1], [], []>} : vector<8x8xf32>, vector<8x9xf32>, vector<8x9xf32> -> vector<8x9xf32>
    %c1 = arith.constant 1 : index
    %c0_21 = arith.constant 0 : index
    %c0_22 = arith.constant 0 : index
    %55 = vector.load %arg2[%c1, %c0_21, %c0_22] : memref<3x9x27xf32, #tpu.memory_space<vmem>>, vector<1x9x27xf32>
    %56 = vector.shape_cast %55 : vector<1x9x27xf32> to vector<9x27xf32>
    %cst_23 = arith.constant dense<0.000000e+00> : vector<8x27xf32>
    %57 = tpu.matmul %54, %56, %cst_23 {dimension_numbers = #tpu.dot_dimension_numbers<[1], [0], [0], [1], [0, 0, 1, 1], [], []>} : vector<8x9xf32>, vector<9x27xf32>, vector<8x27xf32> -> vector<8x27xf32>
    %58 = arith.addf %36, %57 : vector<8x27xf32>
    %59 = vector.extract_strided_slice %12 {offsets = [0, 18], sizes = [8, 9], strides = [1, 1]} : vector<8x27xf32> to vector<8x9xf32>
    %60 = vector.extract_strided_slice %13 {offsets = [0, 18], sizes = [8, 9], strides = [1, 1]} : vector<8x27xf32> to vector<8x9xf32>
    %61 = vector.extract_strided_slice %14 {offsets = [0, 18], sizes = [8, 9], strides = [1, 1]} : vector<8x27xf32> to vector<8x9xf32>
    %cst_24 = arith.constant dense<0.000000e+00> : vector<8x8xf32>
    %62 = tpu.matmul %59, %60, %cst_24 {dimension_numbers = #tpu.dot_dimension_numbers<[1], [1], [0], [0], [0, 0, 1, 0], [], []>} : vector<8x9xf32>, vector<8x9xf32>, vector<8x8xf32> -> vector<8x8xf32>
    %cst_25 = arith.constant 0.333333343 : f32
    %63 = vector.broadcast %cst_25 : f32 to vector<8x8xf32>
    %64 = arith.mulf %62, %63 : vector<8x8xf32>
    %65 = arith.addf %64, %8 : vector<8x8xf32>
    %cst_26 = arith.constant dense<0xFF800000> : vector<8xf32>
    %66 = vector.multi_reduction <maximumf>, %65, %cst_26 [1] : vector<8x8xf32> to vector<8xf32>
    %67 = vector.shape_cast %66 : vector<8xf32> to vector<8x1xf32>
    %68 = vector.broadcast %67 : vector<8x1xf32> to vector<8x8xf32>
    %69 = arith.subf %65, %68 : vector<8x8xf32>
    %70 = math.exp %69 : vector<8x8xf32>
    %cst_27 = arith.constant dense<0.000000e+00> : vector<8xf32>
    %71 = vector.multi_reduction <add>, %70, %cst_27 [1] : vector<8x8xf32> to vector<8xf32>
    %72 = vector.shape_cast %71 : vector<8xf32> to vector<8x1xf32>
    %73 = tpu.reciprocal %72 {approx = true} : vector<8x1xf32> -> vector<8x1xf32>
    %74 = vector.broadcast %73 : vector<8x1xf32> to vector<8x8xf32>
    %75 = arith.mulf %70, %74 : vector<8x8xf32>
    %cst_28 = arith.constant dense<0.000000e+00> : vector<8x9xf32>
    %76 = tpu.matmul %75, %61, %cst_28 {dimension_numbers = #tpu.dot_dimension_numbers<[1], [0], [0], [1], [0, 0, 1, 1], [], []>} : vector<8x8xf32>, vector<8x9xf32>, vector<8x9xf32> -> vector<8x9xf32>
    %c2 = arith.constant 2 : index
    %c0_29 = arith.constant 0 : index
    %c0_30 = arith.constant 0 : index
    %77 = vector.load %arg2[%c2, %c0_29, %c0_30] : memref<3x9x27xf32, #tpu.memory_space<vmem>>, vector<1x9x27xf32>
    %78 = vector.shape_cast %77 : vector<1x9x27xf32> to vector<9x27xf32>
    %cst_31 = arith.constant dense<0.000000e+00> : vector<8x27xf32>
    %79 = tpu.matmul %76, %78, %cst_31 {dimension_numbers = #tpu.dot_dimension_numbers<[1], [0], [0], [1], [0, 0, 1, 1], [], []>} : vector<8x9xf32>, vector<9x27xf32>, vector<8x27xf32> -> vector<8x27xf32>
    %80 = arith.addf %58, %79 : vector<8x27xf32>
    %c0_32 = arith.constant 0 : index
    %c0_33 = arith.constant 0 : index
    %81 = vector.load %arg4[%c0_32, %c0_33] : memref<16x27xf32, #tpu.memory_space<vmem>>, vector<8x27xf32>
    tpu.vector_store %arg4[%c0_32, %c0_33], %80 {strides = array<i32>} : memref<16x27xf32, #tpu.memory_space<vmem>>, vector<8x27xf32>,
    %82 = vector.extract_strided_slice %2 {offsets = [8, 0], sizes = [8, 27], strides = [1, 1]} : vector<16x81xf32> to vector<8x27xf32>
    %83 = vector.extract_strided_slice %2 {offsets = [8, 27], sizes = [8, 27], strides = [1, 1]} : vector<16x81xf32> to vector<8x27xf32>
    %84 = vector.extract_strided_slice %2 {offsets = [8, 54], sizes = [8, 27], strides = [1, 1]} : vector<16x81xf32> to vector<8x27xf32>
    %85 = vector.extract_strided_slice %82 {offsets = [0, 0], sizes = [8, 9], strides = [1, 1]} : vector<8x27xf32> to vector<8x9xf32>
    %86 = vector.extract_strided_slice %83 {offsets = [0, 0], sizes = [8, 9], strides = [1, 1]} : vector<8x27xf32> to vector<8x9xf32>
    %87 = vector.extract_strided_slice %84 {offsets = [0, 0], sizes = [8, 9], strides = [1, 1]} : vector<8x27xf32> to vector<8x9xf32>
    %cst_34 = arith.constant dense<0.000000e+00> : vector<8x8xf32>
    %88 = tpu.matmul %85, %86, %cst_34 {dimension_numbers = #tpu.dot_dimension_numbers<[1], [1], [0], [0], [0, 0, 1, 0], [], []>} : vector<8x9xf32>, vector<8x9xf32>, vector<8x8xf32> -> vector<8x8xf32>
    %cst_35 = arith.constant 0.333333343 : f32
    %89 = vector.broadcast %cst_35 : f32 to vector<8x8xf32>
    %90 = arith.mulf %88, %89 : vector<8x8xf32>
    %91 = arith.addf %90, %8 : vector<8x8xf32>
    %cst_36 = arith.constant dense<0xFF800000> : vector<8xf32>
    %92 = vector.multi_reduction <maximumf>, %91, %cst_36 [1] : vector<8x8xf32> to vector<8xf32>
    %93 = vector.shape_cast %92 : vector<8xf32> to vector<8x1xf32>
    %94 = vector.broadcast %93 : vector<8x1xf32> to vector<8x8xf32>
    %95 = arith.subf %91, %94 : vector<8x8xf32>
    %96 = math.exp %95 : vector<8x8xf32>
    %cst_37 = arith.constant dense<0.000000e+00> : vector<8xf32>
    %97 = vector.multi_reduction <add>, %96, %cst_37 [1] : vector<8x8xf32> to vector<8xf32>
    %98 = vector.shape_cast %97 : vector<8xf32> to vector<8x1xf32>
    %99 = tpu.reciprocal %98 {approx = true} : vector<8x1xf32> -> vector<8x1xf32>
    %100 = vector.broadcast %99 : vector<8x1xf32> to vector<8x8xf32>
    %101 = arith.mulf %96, %100 : vector<8x8xf32>
    %cst_38 = arith.constant dense<0.000000e+00> : vector<8x9xf32>
    %102 = tpu.matmul %101, %87, %cst_38 {dimension_numbers = #tpu.dot_dimension_numbers<[1], [0], [0], [1], [0, 0, 1, 1], [], []>} : vector<8x8xf32>, vector<8x9xf32>, vector<8x9xf32> -> vector<8x9xf32>
    %c0_39 = arith.constant 0 : index
    %c0_40 = arith.constant 0 : index
    %c0_41 = arith.constant 0 : index
    %103 = vector.load %arg2[%c0_39, %c0_40, %c0_41] : memref<3x9x27xf32, #tpu.memory_space<vmem>>, vector<1x9x27xf32>
    %104 = vector.shape_cast %103 : vector<1x9x27xf32> to vector<9x27xf32>
    %cst_42 = arith.constant dense<0.000000e+00> : vector<8x27xf32>
    %105 = tpu.matmul %102, %104, %cst_42 {dimension_numbers = #tpu.dot_dimension_numbers<[1], [0], [0], [1], [0, 0, 1, 1], [], []>} : vector<8x9xf32>, vector<9x27xf32>, vector<8x27xf32> -> vector<8x27xf32>
    %106 = arith.addf %11, %105 : vector<8x27xf32>
    %107 = vector.extract_strided_slice %82 {offsets = [0, 9], sizes = [8, 9], strides = [1, 1]} : vector<8x27xf32> to vector<8x9xf32>
    %108 = vector.extract_strided_slice %83 {offsets = [0, 9], sizes = [8, 9], strides = [1, 1]} : vector<8x27xf32> to vector<8x9xf32>
    %109 = vector.extract_strided_slice %84 {offsets = [0, 9], sizes = [8, 9], strides = [1, 1]} : vector<8x27xf32> to vector<8x9xf32>
    %cst_43 = arith.constant dense<0.000000e+00> : vector<8x8xf32>
    %110 = tpu.matmul %107, %108, %cst_43 {dimension_numbers = #tpu.dot_dimension_numbers<[1], [1], [0], [0], [0, 0, 1, 0], [], []>} : vector<8x9xf32>, vector<8x9xf32>, vector<8x8xf32> -> vector<8x8xf32>
    %cst_44 = arith.constant 0.333333343 : f32
    %111 = vector.broadcast %cst_44 : f32 to vector<8x8xf32>
    %112 = arith.mulf %110, %111 : vector<8x8xf32>
    %113 = arith.addf %112, %8 : vector<8x8xf32>
    %cst_45 = arith.constant dense<0xFF800000> : vector<8xf32>
    %114 = vector.multi_reduction <maximumf>, %113, %cst_45 [1] : vector<8x8xf32> to vector<8xf32>
    %115 = vector.shape_cast %114 : vector<8xf32> to vector<8x1xf32>
    %116 = vector.broadcast %115 : vector<8x1xf32> to vector<8x8xf32>
    %117 = arith.subf %113, %116 : vector<8x8xf32>
    %118 = math.exp %117 : vector<8x8xf32>
    %cst_46 = arith.constant dense<0.000000e+00> : vector<8xf32>
    %119 = vector.multi_reduction <add>, %118, %cst_46 [1] : vector<8x8xf32> to vector<8xf32>
    %120 = vector.shape_cast %119 : vector<8xf32> to vector<8x1xf32>
    %121 = tpu.reciprocal %120 {approx = true} : vector<8x1xf32> -> vector<8x1xf32>
    %122 = vector.broadcast %121 : vector<8x1xf32> to vector<8x8xf32>
    %123 = arith.mulf %118, %122 : vector<8x8xf32>
    %cst_47 = arith.constant dense<0.000000e+00> : vector<8x9xf32>
    %124 = tpu.matmul %123, %109, %cst_47 {dimension_numbers = #tpu.dot_dimension_numbers<[1], [0], [0], [1], [0, 0, 1, 1], [], []>} : vector<8x8xf32>, vector<8x9xf32>, vector<8x9xf32> -> vector<8x9xf32>
    %c1_48 = arith.constant 1 : index
    %c0_49 = arith.constant 0 : index
    %c0_50 = arith.constant 0 : index
    %125 = vector.load %arg2[%c1_48, %c0_49, %c0_50] : memref<3x9x27xf32, #tpu.memory_space<vmem>>, vector<1x9x27xf32>
    %126 = vector.shape_cast %125 : vector<1x9x27xf32> to vector<9x27xf32>
    %cst_51 = arith.constant dense<0.000000e+00> : vector<8x27xf32>
    %127 = tpu.matmul %124, %126, %cst_51 {dimension_numbers = #tpu.dot_dimension_numbers<[1], [0], [0], [1], [0, 0, 1, 1], [], []>} : vector<8x9xf32>, vector<9x27xf32>, vector<8x27xf32> -> vector<8x27xf32>
    %128 = arith.addf %106, %127 : vector<8x27xf32>
    %129 = vector.extract_strided_slice %82 {offsets = [0, 18], sizes = [8, 9], strides = [1, 1]} : vector<8x27xf32> to vector<8x9xf32>
    %130 = vector.extract_strided_slice %83 {offsets = [0, 18], sizes = [8, 9], strides = [1, 1]} : vector<8x27xf32> to vector<8x9xf32>
    %131 = vector.extract_strided_slice %84 {offsets = [0, 18], sizes = [8, 9], strides = [1, 1]} : vector<8x27xf32> to vector<8x9xf32>
    %cst_52 = arith.constant dense<0.000000e+00> : vector<8x8xf32>
    %132 = tpu.matmul %129, %130, %cst_52 {dimension_numbers = #tpu.dot_dimension_numbers<[1], [1], [0], [0], [0, 0, 1, 0], [], []>} : vector<8x9xf32>, vector<8x9xf32>, vector<8x8xf32> -> vector<8x8xf32>
    %cst_53 = arith.constant 0.333333343 : f32
    %133 = vector.broadcast %cst_53 : f32 to vector<8x8xf32>
    %134 = arith.mulf %132, %133 : vector<8x8xf32>
    %135 = arith.addf %134, %8 : vector<8x8xf32>
    %cst_54 = arith.constant dense<0xFF800000> : vector<8xf32>
    %136 = vector.multi_reduction <maximumf>, %135, %cst_54 [1] : vector<8x8xf32> to vector<8xf32>
    %137 = vector.shape_cast %136 : vector<8xf32> to vector<8x1xf32>
    %138 = vector.broadcast %137 : vector<8x1xf32> to vector<8x8xf32>
    %139 = arith.subf %135, %138 : vector<8x8xf32>
    %140 = math.exp %139 : vector<8x8xf32>
    %cst_55 = arith.constant dense<0.000000e+00> : vector<8xf32>
    %141 = vector.multi_reduction <add>, %140, %cst_55 [1] : vector<8x8xf32> to vector<8xf32>
    %142 = vector.shape_cast %141 : vector<8xf32> to vector<8x1xf32>
    %143 = tpu.reciprocal %142 {approx = true} : vector<8x1xf32> -> vector<8x1xf32>
    %144 = vector.broadcast %143 : vector<8x1xf32> to vector<8x8xf32>
    %145 = arith.mulf %140, %144 : vector<8x8xf32>
    %cst_56 = arith.constant dense<0.000000e+00> : vector<8x9xf32>
    %146 = tpu.matmul %145, %131, %cst_56 {dimension_numbers = #tpu.dot_dimension_numbers<[1], [0], [0], [1], [0, 0, 1, 1], [], []>} : vector<8x8xf32>, vector<8x9xf32>, vector<8x9xf32> -> vector<8x9xf32>
    %c2_57 = arith.constant 2 : index
    %c0_58 = arith.constant 0 : index
    %c0_59 = arith.constant 0 : index
    %147 = vector.load %arg2[%c2_57, %c0_58, %c0_59] : memref<3x9x27xf32, #tpu.memory_space<vmem>>, vector<1x9x27xf32>
    %148 = vector.shape_cast %147 : vector<1x9x27xf32> to vector<9x27xf32>
    %cst_60 = arith.constant dense<0.000000e+00> : vector<8x27xf32>
    %149 = tpu.matmul %146, %148, %cst_60 {dimension_numbers = #tpu.dot_dimension_numbers<[1], [0], [0], [1], [0, 0, 1, 1], [], []>} : vector<8x9xf32>, vector<9x27xf32>, vector<8x27xf32> -> vector<8x27xf32>
    %150 = arith.addf %128, %149 : vector<8x27xf32>
    %c8 = arith.constant 8 : index
    %c0_61 = arith.constant 0 : index
    %151 = vector.load %arg4[%c8, %c0_61] : memref<16x27xf32, #tpu.memory_space<vmem>>, vector<8x27xf32>
    tpu.vector_store %arg4[%c8, %c0_61], %150 {strides = array<i32>} : memref<16x27xf32, #tpu.memory_space<vmem>>, vector<8x27xf32>,
    return
  }
}

</mosaic_0001>

<llo_original>
// kernel: tpu_custom_call.1
$region0: #{tpu_custom_call.1}
  #allocation0 [shape = 'u32[]', space=smem, size = 0x4, offset = 0x4, fixed_abs, tag = 'smem constant byte address 0x4 - core index']
  #allocation1 [shape = 'u32[144,128]{1,0:T(1,128)}', space=vmem, size = 0x12000, scoped, tag = 'internal scratch']
  %s0 = inlined_call_operand.vmem [shape: f32[16,27], index: 0, kind: input, shape index: {}]
  %s1 = inlined_call_operand.vmem [shape: f32[27,81], index: 1, kind: input, shape index: {}]
  %s2 = inlined_call_operand.vmem [shape: f32[3,9,27], index: 2, kind: input, shape index: {}]
  %s3 = inlined_call_operand.vmem [shape: f32[1,27], index: 3, kind: input, shape index: {}]
  %s4 = inlined_call_operand.hbm [shape: f32[16,27], index: 4, kind: output, shape index: {}]
  %s5 = sld [smem:[#allocation0]]
  $region26: #{tpu_custom_call.1} parent=0
    _
  %s7 = ssub.s32 1, %s5
  %s8 = scalar_select 0, %s7, %s5
  $region1: #{tpu_custom_call.1} parent=0
    #allocation2 [shape = 'u8[8192]{0}', space=vmem, size = 0x2000, scoped, tag = 'output window, operand 0, single buffered']
    #allocation3 [shape = 's32[1]{0}', space=sflag, size = 0x4, scoped, tag = 'scoped memory for tpu_custom_call.1']
    %9 = vsyncpa [#allocation3], 0
    // Predicated region
    $region2: #{tpu_custom_call.1} parent=1 // pred_check
      _
    $region3: #{tpu_custom_call.1} parent=1 // pred_check_branch
      %11 = sbr.rel (0) target = $region5
    $region4: #{tpu_custom_call.1} parent=1 // pred_region
      _
    $region5: #{tpu_custom_call.1} parent=1 // pred_fallthru
      _
    // Predicated region
    $region6: #{tpu_custom_call.1} parent=1 // pred_check
      _
    $region7: #{tpu_custom_call.1} parent=1 // pred_check_branch
      %13 = sbr.rel (0) target = $region9
    $region8: #{tpu_custom_call.1} parent=1 // pred_region
      _
    $region9: #{tpu_custom_call.1} parent=1 // pred_fallthru
      _
    // Predicated region
    $region10: #{tpu_custom_call.1} parent=1 // pred_check
      _
    $region11: #{tpu_custom_call.1} parent=1 // pred_check_branch
      %15 = sbr.rel (0) target = $region13
    $region12: #{tpu_custom_call.1} parent=1 // pred_region
      _
    $region13: #{tpu_custom_call.1} parent=1 // pred_fallthru
      _
    // Predicated region
    $region14: #{tpu_custom_call.1} parent=1 // pred_check
      _
    $region15: #{tpu_custom_call.1} parent=1 // pred_check_branch
      %17 = sbr.rel (0) target = $region17
    $region16: #{tpu_custom_call.1} parent=1 // pred_region
      _
    $region17: #{tpu_custom_call.1} parent=1 // pred_fallthru
      _
    %v18 = vld [vmem:[%s0] sm:$0xff]
    %v19 = vld [vmem:[%s0 + $0x8] sm:$0xff]
    %v20 = vld [vmem:[%s1] sm:$0xff]
    %v21 = vld [vmem:[%s1 + $0x8] sm:$0xff]
    %v22 = vld [vmem:[%s1 + $0x10] sm:$0xff]
    %v23 = vld [vmem:[%s1 + $0x18] sm:$0x7]
    %vm24 = vcmask 220160
    %v26 = vsel %vm24, %v18, 0
    %v29 = vsel %vm24, %v19, 0
    %vm31 = vcmask 1042432
    %v33 = vsel %vm31, %v23, 0
    %35 = vmatprep.subr.mxu0 0.0
    %36 = vmatpush1.msra.mxu0 0.0
    %37 = vmatprep.subr.mxu0 0.0
    %38 = vmatpush1.msra.mxu0 0.0
    %39 = vmatprep.subr.mxu0 0.0
    %40 = vmatpush1.msra.mxu0 0.0
    %41 = vmatprep.subr.mxu0 0.0
    %42 = vmatpush1.msra.mxu0 0.0
    %43 = vmatprep.subr.mxu0 0.0
    %44 = vmatpush1.msra.mxu0 0.0
    %45 = vmatprep.subr.mxu0 0.0
    %46 = vmatpush1.msra.mxu0 0.0
    %47 = vmatprep.subr.mxu0 0.0
    %48 = vmatpush1.msra.mxu0 0.0
    %49 = vmatprep.subr.mxu0 0.0
    %50 = vmatpush1.msra.mxu0 0.0
    %51 = vmatprep.subr.mxu0 0.0
    %52 = vmatpush1.msra.mxu0 0.0
    %53 = vmatprep.subr.mxu0 0.0
    %54 = vmatpush1.msra.mxu0 0.0
    %55 = vmatprep.subr.mxu0 0.0
    %56 = vmatpush1.msra.mxu0 0.0
    %57 = vmatprep.subr.mxu0 0.0
    %58 = vmatpush1.msra.mxu0 0.0
    %59 = vmatprep.subr.mxu0 0.0
    %60 = vmatpush1.msra.mxu0 %v33
    %61 = vmatprep.subr.mxu0 0.0
    %62 = vmatpush1.msra.mxu0 %v22
    %63 = vmatprep.subr.mxu0 0.0
    %64 = vmatpush1.msra.mxu0 %v21
    %65 = vmatprep.subr.mxu0 0.0
    %66 = vmatpush1.msra.mxu0 %v20
    %67 = vmatprep.subr.mxu0 0.0
    %68 = vmatpush2.msra.mxu0 0.0
    %69 = vmatprep.subr.mxu0 0.0
    %70 = vmatpush2.msra.mxu0 0.0
    %71 = vmatprep.subr.mxu0 0.0
    %72 = vmatpush2.msra.mxu0 0.0
    %73 = vmatprep.subr.mxu0 0.0
    %74 = vmatpush2.msra.mxu0 0.0
    %75 = vmatprep.subr.mxu0 0.0
    %76 = vmatpush2.msra.mxu0 0.0
    %77 = vmatprep.subr.mxu0 0.0
    %78 = vmatpush2.msra.mxu0 0.0
    %79 = vmatprep.subr.mxu0 0.0
    %80 = vmatpush2.msra.mxu0 0.0
    %81 = vmatprep.subr.mxu0 0.0
    %82 = vmatpush2.msra.mxu0 0.0
    %83 = vmatprep.subr.mxu0 0.0
    %84 = vmatpush2.msra.mxu0 0.0
    %85 = vmatprep.subr.mxu0 0.0
    %86 = vmatpush2.msra.mxu0 0.0
    %87 = vmatprep.subr.mxu0 0.0
    %88 = vmatpush2.msra.mxu0 0.0
    %89 = vmatprep.subr.mxu0 0.0
    %90 = vmatpush2.msra.mxu0 0.0
    %91 = vmatprep.subr.mxu0 0.0
    %92 = vmatpush2.msra.mxu0 0.0
    %93 = vmatprep.subr.mxu0 0.0
    %94 = vmatpush2.msra.mxu0 0.0
    %95 = vmatprep.subr.mxu0 0.0
    %96 = vmatpush2.msra.mxu0 0.0
    %97 = vmatprep.subr.mxu0 0.0
    %98 = vmatpush2.msra.mxu0 0.0
    %99 = vmatprep.mubr.f32.mxu0 0.0
    %100 = vmatmul.mubr.f32.gmra.mxu0 %v26
    %v101 = vpop.f32.mrf.mxu0
    %v102 = vadd.f32 0.0, %v101
    %v103 = vpop.f32.mrf.mxu0
    %104 = vmatprep.mubr.f32.mxu0 0.0
    %105 = vmatmul.mubr.f32.gmra.mxu0 %v29
    %v106 = vpop.f32.mrf.mxu0
    %v107 = vadd.f32 0.0, %v106
    %v108 = vpop.f32.mrf.mxu0
    %109 = vdwg.mxu0
    %v110 = vlaneseq
    %v111 = vshrl.u32 %v110, 7
    %v112 = vlaneseq
    %v113 = vand.u32 %v112, 127
    %vm114 = vcmp.ge.s32.totalorder %v111, %v113
    %v115 = vsel %vm114, 0.0, -1e+30
    %v116 = vld [vmem:[%s3] sm:$0x1]
    %v118 = vlaneseq
    %v119 = vshrl.u32 %v118, 7
    %v120 = vsub.s32 0, %v119
    %v121 = vrot.slane %v116, %v120
    %124 = vrot.lane.b32.xlu0 %v102, 101
    %v125 = vpop.permute.xlu0 %124
    %vm126 = vcmask 72704
    %v127 = vsel %vm126, %v102, 0
    %v129 = vsel %vm126, %v125, 0
    %131 = vmatprep.subr.mxu0 0.0
    %132 = vmatpush1.xpose.msra.mxu0 0.0
    %133 = vmatprep.subr.mxu0 0.0
    %134 = vmatpush1.xpose.msra.mxu0 0.0
    %135 = vmatprep.subr.mxu0 0.0
    %136 = vmatpush1.xpose.msra.mxu0 0.0
    %137 = vmatprep.subr.mxu0 0.0
    %138 = vmatpush1.xpose.msra.mxu0 0.0
    %139 = vmatprep.subr.mxu0 0.0
    %140 = vmatpush1.xpose.msra.mxu0 0.0
    %141 = vmatprep.subr.mxu0 0.0
    %142 = vmatpush1.xpose.msra.mxu0 0.0
    %143 = vmatprep.subr.mxu0 0.0
    %144 = vmatpush1.xpose.msra.mxu0 0.0
    %145 = vmatprep.subr.mxu0 0.0
    %146 = vmatpush1.xpose.msra.mxu0 0.0
    %147 = vmatprep.subr.mxu0 0.0
    %148 = vmatpush1.xpose.msra.mxu0 0.0
    %149 = vmatprep.subr.mxu0 0.0
    %150 = vmatpush1.xpose.msra.mxu0 0.0
    %151 = vmatprep.subr.mxu0 0.0
    %152 = vmatpush1.xpose.msra.mxu0 0.0
    %153 = vmatprep.subr.mxu0 0.0
    %154 = vmatpush1.xpose.msra.mxu0 0.0
    %155 = vmatprep.subr.mxu0 0.0
    %156 = vmatpush1.xpose.msra.mxu0 0.0
    %157 = vmatprep.subr.mxu0 0.0
    %158 = vmatpush1.xpose.msra.mxu0 0.0
    %159 = vmatprep.subr.mxu0 0.0
    %160 = vmatpush1.xpose.msra.mxu0 0.0
    %161 = vmatprep.subr.mxu0 0.0
    %162 = vmatpush1.xpose.msra.mxu0 %v129
    %163 = vmatprep.subr.mxu0 0.0
    %164 = vmatpush2.xpose.msra.mxu0 0.0
    %165 = vmatprep.subr.mxu0 0.0
    %166 = vmatpush2.xpose.msra.mxu0 0.0
    %167 = vmatprep.subr.mxu0 0.0
    %168 = vmatpush2.xpose.msra.mxu0 0.0
    %169 = vmatprep.subr.mxu0 0.0
    %170 = vmatpush2.xpose.msra.mxu0 0.0
    %171 = vmatprep.subr.mxu0 0.0
    %172 = vmatpush2.xpose.msra.mxu0 0.0
    %173 = vmatprep.subr.mxu0 0.0
    %174 = vmatpush2.xpose.msra.mxu0 0.0
    %175 = vmatprep.subr.mxu0 0.0
    %176 = vmatpush2.xpose.msra.mxu0 0.0
    %177 = vmatprep.subr.mxu0 0.0
    %178 = vmatpush2.xpose.msra.mxu0 0.0
    %179 = vmatprep.subr.mxu0 0.0
    %180 = vmatpush2.xpose.msra.mxu0 0.0
    %181 = vmatprep.subr.mxu0 0.0
    %182 = vmatpush2.xpose.msra.mxu0 0.0
    %183 = vmatprep.subr.mxu0 0.0
    %184 = vmatpush2.xpose.msra.mxu0 0.0
    %185 = vmatprep.subr.mxu0 0.0
    %186 = vmatpush2.xpose.msra.mxu0 0.0
    %187 = vmatprep.subr.mxu0 0.0
    %188 = vmatpush2.xpose.msra.mxu0 0.0
    %189 = vmatprep.subr.mxu0 0.0
    %190 = vmatpush2.xpose.msra.mxu0 0.0
    %191 = vmatprep.subr.mxu0 0.0
    %192 = vmatpush2.xpose.msra.mxu0 0.0
    %193 = vmatprep.subr.mxu0 0.0
    %194 = vmatpush2.xpose.msra.mxu0 0.0
    %195 = vmatprep.mubr.f32.mxu0 0.0
    %196 = vmatmul.mubr.f32.gmra.mxu0 %v127
    %v197 = vpop.f32.mrf.mxu0
    %v198 = vadd.f32 0.0, %v197
    %v199 = vpop.f32.mrf.mxu0
    %200 = vdwg.mxu0
    %v201 = vmul.f32 %v198, 0.33333334
    %v202 = vadd.f32 %v201, %v115
    %vm203 = vcmask 64512
    %v204 = vsel %vm203, %v202, -inf
    %205 = vmax.xlane.f32.xlu0 %v204
    %v206 = vpop.xlane.xlu0 %205
    %v207 = vsub.f32 %v202, %v206
    %v208 = vmul.f32 %v207, 1.442695
    %v209 = vpow.pop %v208
    %v210 = vsel %vm203, %v209, 0.0
    %211 = vadd.xlane.f32.xlu0 %v210
    %v212 = vpop.xlane.xlu0 %211
    %v213 = vrcp.pop %v212
    %v214 = vmul.f32 %v209, %v213
    %215 = vrot.lane.b32.xlu0 %v102, 74
    %v216 = vpop.permute.xlu0 %215
    %v219 = vsel %vm203, %v214, 0
    %221 = vmatprep.subr.mxu0 0.0
    %222 = vmatpush1.msra.mxu0 0.0
    %223 = vmatprep.subr.mxu0 0.0
    %224 = vmatpush1.msra.mxu0 0.0
    %225 = vmatprep.subr.mxu0 0.0
    %226 = vmatpush1.msra.mxu0 0.0
    %227 = vmatprep.subr.mxu0 0.0
    %228 = vmatpush1.msra.mxu0 0.0
    %229 = vmatprep.subr.mxu0 0.0
    %230 = vmatpush1.msra.mxu0 0.0
    %231 = vmatprep.subr.mxu0 0.0
    %232 = vmatpush1.msra.mxu0 0.0
    %233 = vmatprep.subr.mxu0 0.0
    %234 = vmatpush1.msra.mxu0 0.0
    %235 = vmatprep.subr.mxu0 0.0
    %236 = vmatpush1.msra.mxu0 0.0
    %237 = vmatprep.subr.mxu0 0.0
    %238 = vmatpush1.msra.mxu0 0.0
    %239 = vmatprep.subr.mxu0 0.0
    %240 = vmatpush1.msra.mxu0 0.0
    %241 = vmatprep.subr.mxu0 0.0
    %242 = vmatpush1.msra.mxu0 0.0
    %243 = vmatprep.subr.mxu0 0.0
    %244 = vmatpush1.msra.mxu0 0.0
    %245 = vmatprep.subr.mxu0 0.0
    %246 = vmatpush1.msra.mxu0 0.0
    %247 = vmatprep.subr.mxu0 0.0
    %248 = vmatpush1.msra.mxu0 0.0
    %249 = vmatprep.subr.mxu0 0.0
    %250 = vmatpush1.msra.mxu0 0.0
    %251 = vmatprep.subr.mxu0 0.0
    %252 = vmatpush1.msra.mxu0 %v216
    %253 = vmatprep.subr.mxu0 0.0
    %254 = vmatpush2.msra.mxu0 0.0
    %255 = vmatprep.subr.mxu0 0.0
    %256 = vmatpush2.msra.mxu0 0.0
    %257 = vmatprep.subr.mxu0 0.0
    %258 = vmatpush2.msra.mxu0 0.0
    %259 = vmatprep.subr.mxu0 0.0
    %260 = vmatpush2.msra.mxu0 0.0
    %261 = vmatprep.subr.mxu0 0.0
    %262 = vmatpush2.msra.mxu0 0.0
    %263 = vmatprep.subr.mxu0 0.0
    %264 = vmatpush2.msra.mxu0 0.0
    %265 = vmatprep.subr.mxu0 0.0
    %266 = vmatpush2.msra.mxu0 0.0
    %267 = vmatprep.subr.mxu0 0.0
    %268 = vmatpush2.msra.mxu0 0.0
    %269 = vmatprep.subr.mxu0 0.0
    %270 = vmatpush2.msra.mxu0 0.0
    %271 = vmatprep.subr.mxu0 0.0
    %272 = vmatpush2.msra.mxu0 0.0
    %273 = vmatprep.subr.mxu0 0.0
    %274 = vmatpush2.msra.mxu0 0.0
    %275 = vmatprep.subr.mxu0 0.0
    %276 = vmatpush2.msra.mxu0 0.0
    %277 = vmatprep.subr.mxu0 0.0
    %278 = vmatpush2.msra.mxu0 0.0
    %279 = vmatprep.subr.mxu0 0.0
    %280 = vmatpush2.msra.mxu0 0.0
    %281 = vmatprep.subr.mxu0 0.0
    %282 = vmatpush2.msra.mxu0 0.0
    %283 = vmatprep.subr.mxu0 0.0
    %284 = vmatpush2.msra.mxu0 0.0
    %285 = vmatprep.mubr.f32.mxu0 0.0
    %286 = vmatmul.mubr.f32.gmra.mxu0 %v219
    %v287 = vpop.f32.mrf.mxu0
    %v288 = vadd.f32 0.0, %v287
    %v289 = vpop.f32.mrf.mxu0
    %290 = vdwg.mxu0
    %v291 = vld [vmem:[%s2] sm:$0xff]
    %v292 = vld [vmem:[%s2 + $0x8] sm:$0x1]
    %v294 = vsel %vm126, %v288, 0
    %vm296 = vcmask 1040384
    %v298 = vsel %vm296, %v292, 0
    %300 = vmatprep.subr.mxu0 0.0
    %301 = vmatpush1.msra.mxu0 0.0
    %302 = vmatprep.subr.mxu0 0.0
    %303 = vmatpush1.msra.mxu0 0.0
    %304 = vmatprep.subr.mxu0 0.0
    %305 = vmatpush1.msra.mxu0 0.0
    %306 = vmatprep.subr.mxu0 0.0
    %307 = vmatpush1.msra.mxu0 0.0
    %308 = vmatprep.subr.mxu0 0.0
    %309 = vmatpush1.msra.mxu0 0.0
    %310 = vmatprep.subr.mxu0 0.0
    %311 = vmatpush1.msra.mxu0 0.0
    %312 = vmatprep.subr.mxu0 0.0
    %313 = vmatpush1.msra.mxu0 0.0
    %314 = vmatprep.subr.mxu0 0.0
    %315 = vmatpush1.msra.mxu0 0.0
    %316 = vmatprep.subr.mxu0 0.0
    %317 = vmatpush1.msra.mxu0 0.0
    %318 = vmatprep.subr.mxu0 0.0
    %319 = vmatpush1.msra.mxu0 0.0
    %320 = vmatprep.subr.mxu0 0.0
    %321 = vmatpush1.msra.mxu0 0.0
    %322 = vmatprep.subr.mxu0 0.0
    %323 = vmatpush1.msra.mxu0 0.0
    %324 = vmatprep.subr.mxu0 0.0
    %325 = vmatpush1.msra.mxu0 0.0
    %326 = vmatprep.subr.mxu0 0.0
    %327 = vmatpush1.msra.mxu0 0.0
    %328 = vmatprep.subr.mxu0 0.0
    %329 = vmatpush1.msra.mxu0 %v298
    %330 = vmatprep.subr.mxu0 0.0
    %331 = vmatpush1.msra.mxu0 %v291
    %332 = vmatprep.subr.mxu0 0.0
    %333 = vmatpush2.msra.mxu0 0.0
    %334 = vmatprep.subr.mxu0 0.0
    %335 = vmatpush2.msra.mxu0 0.0
    %336 = vmatprep.subr.mxu0 0.0
    %337 = vmatpush2.msra.mxu0 0.0
    %338 = vmatprep.subr.mxu0 0.0
    %339 = vmatpush2.msra.mxu0 0.0
    %340 = vmatprep.subr.mxu0 0.0
    %341 = vmatpush2.msra.mxu0 0.0
    %342 = vmatprep.subr.mxu0 0.0
    %343 = vmatpush2.msra.mxu0 0.0
    %344 = vmatprep.subr.mxu0 0.0
    %345 = vmatpush2.msra.mxu0 0.0
    %346 = vmatprep.subr.mxu0 0.0
    %347 = vmatpush2.msra.mxu0 0.0
    %348 = vmatprep.subr.mxu0 0.0
    %349 = vmatpush2.msra.mxu0 0.0
    %350 = vmatprep.subr.mxu0 0.0
    %351 = vmatpush2.msra.mxu0 0.0
    %352 = vmatprep.subr.mxu0 0.0
    %353 = vmatpush2.msra.mxu0 0.0
    %354 = vmatprep.subr.mxu0 0.0
    %355 = vmatpush2.msra.mxu0 0.0
    %356 = vmatprep.subr.mxu0 0.0
    %357 = vmatpush2.msra.mxu0 0.0
    %358 = vmatprep.subr.mxu0 0.0
    %359 = vmatpush2.msra.mxu0 0.0
    %360 = vmatprep.subr.mxu0 0.0
    %361 = vmatpush2.msra.mxu0 0.0
    %362 = vmatprep.subr.mxu0 0.0
    %363 = vmatpush2.msra.mxu0 0.0
    %364 = vmatprep.mubr.f32.mxu0 0.0
    %365 = vmatmul.mubr.f32.gmra.mxu0 %v294
    %v366 = vpop.f32.mrf.mxu0
    %v367 = vadd.f32 0.0, %v366
    %v368 = vpop.f32.mrf.mxu0
    %369 = vdwg.mxu0
    %v370 = vadd.f32 %v121, %v367
    %371 = vrot.lane.b32.xlu0 %v102, 119
    %v372 = vpop.permute.xlu0 %371
    %373 = vrot.lane.b32.xlu0 %v102, 92
    %v374 = vpop.permute.xlu0 %373
    %v375 = vsel %vm126, %v372, 0
    %v377 = vsel %vm126, %v374, 0
    %379 = vmatprep.subr.mxu0 0.0
    %380 = vmatpush1.xpose.msra.mxu0 0.0
    %381 = vmatprep.subr.mxu0 0.0
    %382 = vmatpush1.xpose.msra.mxu0 0.0
    %383 = vmatprep.subr.mxu0 0.0
    %384 = vmatpush1.xpose.msra.mxu0 0.0
    %385 = vmatprep.subr.mxu0 0.0
    %386 = vmatpush1.xpose.msra.mxu0 0.0
    %387 = vmatprep.subr.mxu0 0.0
    %388 = vmatpush1.xpose.msra.mxu0 0.0
    %389 = vmatprep.subr.mxu0 0.0
    %390 = vmatpush1.xpose.msra.mxu0 0.0
    %391 = vmatprep.subr.mxu0 0.0
    %392 = vmatpush1.xpose.msra.mxu0 0.0
    %393 = vmatprep.subr.mxu0 0.0
    %394 = vmatpush1.xpose.msra.mxu0 0.0
    %395 = vmatprep.subr.mxu0 0.0
    %396 = vmatpush1.xpose.msra.mxu0 0.0
    %397 = vmatprep.subr.mxu0 0.0
    %398 = vmatpush1.xpose.msra.mxu0 0.0
    %399 = vmatprep.subr.mxu0 0.0
    %400 = vmatpush1.xpose.msra.mxu0 0.0
    %401 = vmatprep.subr.mxu0 0.0
    %402 = vmatpush1.xpose.msra.mxu0 0.0
    %403 = vmatprep.subr.mxu0 0.0
    %404 = vmatpush1.xpose.msra.mxu0 0.0
    %405 = vmatprep.subr.mxu0 0.0
    %406 = vmatpush1.xpose.msra.mxu0 0.0
    %407 = vmatprep.subr.mxu0 0.0
    %408 = vmatpush1.xpose.msra.mxu0 0.0
    %409 = vmatprep.subr.mxu0 0.0
    %410 = vmatpush1.xpose.msra.mxu0 %v377
    %411 = vmatprep.subr.mxu0 0.0
    %412 = vmatpush2.xpose.msra.mxu0 0.0
    %413 = vmatprep.subr.mxu0 0.0
    %414 = vmatpush2.xpose.msra.mxu0 0.0
    %415 = vmatprep.subr.mxu0 0.0
    %416 = vmatpush2.xpose.msra.mxu0 0.0
    %417 = vmatprep.subr.mxu0 0.0
    %418 = vmatpush2.xpose.msra.mxu0 0.0
    %419 = vmatprep.subr.mxu0 0.0
    %420 = vmatpush2.xpose.msra.mxu0 0.0
    %421 = vmatprep.subr.mxu0 0.0
    %422 = vmatpush2.xpose.msra.mxu0 0.0
    %423 = vmatprep.subr.mxu0 0.0
    %424 = vmatpush2.xpose.msra.mxu0 0.0
    %425 = vmatprep.subr.mxu0 0.0
    %426 = vmatpush2.xpose.msra.mxu0 0.0
    %427 = vmatprep.subr.mxu0 0.0
    %428 = vmatpush2.xpose.msra.mxu0 0.0
    %429 = vmatprep.subr.mxu0 0.0
    %430 = vmatpush2.xpose.msra.mxu0 0.0
    %431 = vmatprep.subr.mxu0 0.0
    %432 = vmatpush2.xpose.msra.mxu0 0.0
    %433 = vmatprep.subr.mxu0 0.0
    %434 = vmatpush2.xpose.msra.mxu0 0.0
    %435 = vmatprep.subr.mxu0 0.0
    %436 = vmatpush2.xpose.msra.mxu0 0.0
    %437 = vmatprep.subr.mxu0 0.0
    %438 = vmatpush2.xpose.msra.mxu0 0.0
    %439 = vmatprep.subr.mxu0 0.0
    %440 = vmatpush2.xpose.msra.mxu0 0.0
    %441 = vmatprep.subr.mxu0 0.0
    %442 = vmatpush2.xpose.msra.mxu0 0.0
    %443 = vmatprep.mubr.f32.mxu0 0.0
    %444 = vmatmul.mubr.f32.gmra.mxu0 %v375
    %v445 = vpop.f32.mrf.mxu0
    %v446 = vadd.f32 0.0, %v445
    %v447 = vpop.f32.mrf.mxu0
    %448 = vdwg.mxu0
    %v449 = vmul.f32 %v446, 0.33333334
    %v450 = vadd.f32 %v449, %v115
    %v451 = vsel %vm203, %v450, -inf
    %452 = vmax.xlane.f32.xlu0 %v451
    %v453 = vpop.xlane.xlu0 %452
    %v454 = vsub.f32 %v450, %v453
    %v455 = vmul.f32 %v454, 1.442695
    %v456 = vpow.pop %v455
    %v457 = vsel %vm203, %v456, 0.0
    %458 = vadd.xlane.f32.xlu0 %v457
    %v459 = vpop.xlane.xlu0 %458
    %v460 = vrcp.pop %v459
    %v461 = vmul.f32 %v456, %v460
    %462 = vrot.lane.b32.xlu0 %v102, 65
    %v463 = vpop.permute.xlu0 %462
    %v466 = vsel %vm203, %v461, 0
    %468 = vmatprep.subr.mxu0 0.0
    %469 = vmatpush1.msra.mxu0 0.0
    %470 = vmatprep.subr.mxu0 0.0
    %471 = vmatpush1.msra.mxu0 0.0
    %472 = vmatprep.subr.mxu0 0.0
    %473 = vmatpush1.msra.mxu0 0.0
    %474 = vmatprep.subr.mxu0 0.0
    %475 = vmatpush1.msra.mxu0 0.0
    %476 = vmatprep.subr.mxu0 0.0
    %477 = vmatpush1.msra.mxu0 0.0
    %478 = vmatprep.subr.mxu0 0.0
    %479 = vmatpush1.msra.mxu0 0.0
    %480 = vmatprep.subr.mxu0 0.0
    %481 = vmatpush1.msra.mxu0 0.0
    %482 = vmatprep.subr.mxu0 0.0
    %483 = vmatpush1.msra.mxu0 0.0
    %484 = vmatprep.subr.mxu0 0.0
    %485 = vmatpush1.msra.mxu0 0.0
    %486 = vmatprep.subr.mxu0 0.0
    %487 = vmatpush1.msra.mxu0 0.0
    %488 = vmatprep.subr.mxu0 0.0
    %489 = vmatpush1.msra.mxu0 0.0
    %490 = vmatprep.subr.mxu0 0.0
    %491 = vmatpush1.msra.mxu0 0.0
    %492 = vmatprep.subr.mxu0 0.0
    %493 = vmatpush1.msra.mxu0 0.0
    %494 = vmatprep.subr.mxu0 0.0
    %495 = vmatpush1.msra.mxu0 0.0
    %496 = vmatprep.subr.mxu0 0.0
    %497 = vmatpush1.msra.mxu0 0.0
    %498 = vmatprep.subr.mxu0 0.0
    %499 = vmatpush1.msra.mxu0 %v463
    %500 = vmatprep.subr.mxu0 0.0
    %501 = vmatpush2.msra.mxu0 0.0
    %502 = vmatprep.subr.mxu0 0.0
    %503 = vmatpush2.msra.mxu0 0.0
    %504 = vmatprep.subr.mxu0 0.0
    %505 = vmatpush2.msra.mxu0 0.0
    %506 = vmatprep.subr.mxu0 0.0
    %507 = vmatpush2.msra.mxu0 0.0
    %508 = vmatprep.subr.mxu0 0.0
    %509 = vmatpush2.msra.mxu0 0.0
    %510 = vmatprep.subr.mxu0 0.0
    %511 = vmatpush2.msra.mxu0 0.0
    %512 = vmatprep.subr.mxu0 0.0
    %513 = vmatpush2.msra.mxu0 0.0
    %514 = vmatprep.subr.mxu0 0.0
    %515 = vmatpush2.msra.mxu0 0.0
    %516 = vmatprep.subr.mxu0 0.0
    %517 = vmatpush2.msra.mxu0 0.0
    %518 = vmatprep.subr.mxu0 0.0
    %519 = vmatpush2.msra.mxu0 0.0
    %520 = vmatprep.subr.mxu0 0.0
    %521 = vmatpush2.msra.mxu0 0.0
    %522 = vmatprep.subr.mxu0 0.0
    %523 = vmatpush2.msra.mxu0 0.0
    %524 = vmatprep.subr.mxu0 0.0
    %525 = vmatpush2.msra.mxu0 0.0
    %526 = vmatprep.subr.mxu0 0.0
    %527 = vmatpush2.msra.mxu0 0.0
    %528 = vmatprep.subr.mxu0 0.0
    %529 = vmatpush2.msra.mxu0 0.0
    %530 = vmatprep.subr.mxu0 0.0
    %531 = vmatpush2.msra.mxu0 0.0
    %532 = vmatprep.mubr.f32.mxu0 0.0
    %533 = vmatmul.mubr.f32.gmra.mxu0 %v466
    %v534 = vpop.f32.mrf.mxu0
    %v535 = vadd.f32 0.0, %v534
    %v536 = vpop.f32.mrf.mxu0
    %537 = vdwg.mxu0
    %s538 = scalar_lea.vmem %s2, 16
    %v539 = vld [vmem:[%s538] sm:$0xff]
    %v540 = vld [vmem:[%s538 + $0x8] sm:$0x1]
    %v542 = vsel %vm126, %v535, 0
    %v545 = vsel %vm296, %v540, 0
    %547 = vmatprep.subr.mxu0 0.0
    %548 = vmatpush1.msra.mxu0 0.0
    %549 = vmatprep.subr.mxu0 0.0
    %550 = vmatpush1.msra.mxu0 0.0
    %551 = vmatprep.subr.mxu0 0.0
    %552 = vmatpush1.msra.mxu0 0.0
    %553 = vmatprep.subr.mxu0 0.0
    %554 = vmatpush1.msra.mxu0 0.0
    %555 = vmatprep.subr.mxu0 0.0
    %556 = vmatpush1.msra.mxu0 0.0
    %557 = vmatprep.subr.mxu0 0.0
    %558 = vmatpush1.msra.mxu0 0.0
    %559 = vmatprep.subr.mxu0 0.0
    %560 = vmatpush1.msra.mxu0 0.0
    %561 = vmatprep.subr.mxu0 0.0
    %562 = vmatpush1.msra.mxu0 0.0
    %563 = vmatprep.subr.mxu0 0.0
    %564 = vmatpush1.msra.mxu0 0.0
    %565 = vmatprep.subr.mxu0 0.0
    %566 = vmatpush1.msra.mxu0 0.0
    %567 = vmatprep.subr.mxu0 0.0
    %568 = vmatpush1.msra.mxu0 0.0
    %569 = vmatprep.subr.mxu0 0.0
    %570 = vmatpush1.msra.mxu0 0.0
    %571 = vmatprep.subr.mxu0 0.0
    %572 = vmatpush1.msra.mxu0 0.0
    %573 = vmatprep.subr.mxu0 0.0
    %574 = vmatpush1.msra.mxu0 0.0
    %575 = vmatprep.subr.mxu0 0.0
    %576 = vmatpush1.msra.mxu0 %v545
    %577 = vmatprep.subr.mxu0 0.0
    %578 = vmatpush1.msra.mxu0 %v539
    %579 = vmatprep.subr.mxu0 0.0
    %580 = vmatpush2.msra.mxu0 0.0
    %581 = vmatprep.subr.mxu0 0.0
    %582 = vmatpush2.msra.mxu0 0.0
    %583 = vmatprep.subr.mxu0 0.0
    %584 = vmatpush2.msra.mxu0 0.0
    %585 = vmatprep.subr.mxu0 0.0
    %586 = vmatpush2.msra.mxu0 0.0
    %587 = vmatprep.subr.mxu0 0.0
    %588 = vmatpush2.msra.mxu0 0.0
    %589 = vmatprep.subr.mxu0 0.0
    %590 = vmatpush2.msra.mxu0 0.0
    %591 = vmatprep.subr.mxu0 0.0
    %592 = vmatpush2.msra.mxu0 0.0
    %593 = vmatprep.subr.mxu0 0.0
    %594 = vmatpush2.msra.mxu0 0.0
    %595 = vmatprep.subr.mxu0 0.0
    %596 = vmatpush2.msra.mxu0 0.0
    %597 = vmatprep.subr.mxu0 0.0
    %598 = vmatpush2.msra.mxu0 0.0
    %599 = vmatprep.subr.mxu0 0.0
    %600 = vmatpush2.msra.mxu0 0.0
    %601 = vmatprep.subr.mxu0 0.0
    %602 = vmatpush2.msra.mxu0 0.0
    %603 = vmatprep.subr.mxu0 0.0
    %604 = vmatpush2.msra.mxu0 0.0
    %605 = vmatprep.subr.mxu0 0.0
    %606 = vmatpush2.msra.mxu0 0.0
    %607 = vmatprep.subr.mxu0 0.0
    %608 = vmatpush2.msra.mxu0 0.0
    %609 = vmatprep.subr.mxu0 0.0
    %610 = vmatpush2.msra.mxu0 0.0
    %611 = vmatprep.mubr.f32.mxu0 0.0
    %612 = vmatmul.mubr.f32.gmra.mxu0 %v542
    %v613 = vpop.f32.mrf.mxu0
    %v614 = vadd.f32 0.0, %v613
    %v615 = vpop.f32.mrf.mxu0
    %616 = vdwg.mxu0
    %v617 = vadd.f32 %v370, %v614
    %618 = vrot.lane.b32.xlu0 %v102, 110
    %v619 = vpop.permute.xlu0 %618
    %620 = vrot.lane.b32.xlu0 %v102, 83
    %v621 = vpop.permute.xlu0 %620
    %v622 = vsel %vm126, %v619, 0
    %v624 = vsel %vm126, %v621, 0
    %626 = vmatprep.subr.mxu0 0.0
    %627 = vmatpush1.xpose.msra.mxu0 0.0
    %628 = vmatprep.subr.mxu0 0.0
    %629 = vmatpush1.xpose.msra.mxu0 0.0
    %630 = vmatprep.subr.mxu0 0.0
    %631 = vmatpush1.xpose.msra.mxu0 0.0
    %632 = vmatprep.subr.mxu0 0.0
    %633 = vmatpush1.xpose.msra.mxu0 0.0
    %634 = vmatprep.subr.mxu0 0.0
    %635 = vmatpush1.xpose.msra.mxu0 0.0
    %636 = vmatprep.subr.mxu0 0.0
    %637 = vmatpush1.xpose.msra.mxu0 0.0
    %638 = vmatprep.subr.mxu0 0.0
    %639 = vmatpush1.xpose.msra.mxu0 0.0
    %640 = vmatprep.subr.mxu0 0.0
    %641 = vmatpush1.xpose.msra.mxu0 0.0
    %642 = vmatprep.subr.mxu0 0.0
    %643 = vmatpush1.xpose.msra.mxu0 0.0
    %644 = vmatprep.subr.mxu0 0.0
    %645 = vmatpush1.xpose.msra.mxu0 0.0
    %646 = vmatprep.subr.mxu0 0.0
    %647 = vmatpush1.xpose.msra.mxu0 0.0
    %648 = vmatprep.subr.mxu0 0.0
    %649 = vmatpush1.xpose.msra.mxu0 0.0
    %650 = vmatprep.subr.mxu0 0.0
    %651 = vmatpush1.xpose.msra.mxu0 0.0
    %652 = vmatprep.subr.mxu0 0.0
    %653 = vmatpush1.xpose.msra.mxu0 0.0
    %654 = vmatprep.subr.mxu0 0.0
    %655 = vmatpush1.xpose.msra.mxu0 0.0
    %656 = vmatprep.subr.mxu0 0.0
    %657 = vmatpush1.xpose.msra.mxu0 %v624
    %658 = vmatprep.subr.mxu0 0.0
    %659 = vmatpush2.xpose.msra.mxu0 0.0
    %660 = vmatprep.subr.mxu0 0.0
    %661 = vmatpush2.xpose.msra.mxu0 0.0
    %662 = vmatprep.subr.mxu0 0.0
    %663 = vmatpush2.xpose.msra.mxu0 0.0
    %664 = vmatprep.subr.mxu0 0.0
    %665 = vmatpush2.xpose.msra.mxu0 0.0
    %666 = vmatprep.subr.mxu0 0.0
    %667 = vmatpush2.xpose.msra.mxu0 0.0
    %668 = vmatprep.subr.mxu0 0.0
    %669 = vmatpush2.xpose.msra.mxu0 0.0
    %670 = vmatprep.subr.mxu0 0.0
    %671 = vmatpush2.xpose.msra.mxu0 0.0
    %672 = vmatprep.subr.mxu0 0.0
    %673 = vmatpush2.xpose.msra.mxu0 0.0
    %674 = vmatprep.subr.mxu0 0.0
    %675 = vmatpush2.xpose.msra.mxu0 0.0
    %676 = vmatprep.subr.mxu0 0.0
    %677 = vmatpush2.xpose.msra.mxu0 0.0
    %678 = vmatprep.subr.mxu0 0.0
    %679 = vmatpush2.xpose.msra.mxu0 0.0
    %680 = vmatprep.subr.mxu0 0.0
    %681 = vmatpush2.xpose.msra.mxu0 0.0
    %682 = vmatprep.subr.mxu0 0.0
    %683 = vmatpush2.xpose.msra.mxu0 0.0
    %684 = vmatprep.subr.mxu0 0.0
    %685 = vmatpush2.xpose.msra.mxu0 0.0
    %686 = vmatprep.subr.mxu0 0.0
    %687 = vmatpush2.xpose.msra.mxu0 0.0
    %688 = vmatprep.subr.mxu0 0.0
    %689 = vmatpush2.xpose.msra.mxu0 0.0
    %690 = vmatprep.mubr.f32.mxu0 0.0
    %691 = vmatmul.mubr.f32.gmra.mxu0 %v622
    %v692 = vpop.f32.mrf.mxu0
    %v693 = vadd.f32 0.0, %v692
    %v694 = vpop.f32.mrf.mxu0
    %695 = vdwg.mxu0
    %v696 = vmul.f32 %v693, 0.33333334
    %v697 = vadd.f32 %v696, %v115
    %v698 = vsel %vm203, %v697, -inf
    %699 = vmax.xlane.f32.xlu0 %v698
    %v700 = vpop.xlane.xlu0 %699
    %v701 = vsub.f32 %v697, %v700
    %v702 = vmul.f32 %v701, 1.442695
    %v703 = vpow.pop %v702
    %v704 = vsel %vm203, %v703, 0.0
    %705 = vadd.xlane.f32.xlu0 %v704
    %v706 = vpop.xlane.xlu0 %705
    %v707 = vrcp.pop %v706
    %v708 = vmul.f32 %v703, %v707
    %709 = vrot.lane.b32.xlu0 %v102, 56
    %v710 = vpop.permute.xlu0 %709
    %v713 = vsel %vm203, %v708, 0
    %715 = vmatprep.subr.mxu0 0.0
    %716 = vmatpush1.msra.mxu0 0.0
    %717 = vmatprep.subr.mxu0 0.0
    %718 = vmatpush1.msra.mxu0 0.0
    %719 = vmatprep.subr.mxu0 0.0
    %720 = vmatpush1.msra.mxu0 0.0
    %721 = vmatprep.subr.mxu0 0.0
    %722 = vmatpush1.msra.mxu0 0.0
    %723 = vmatprep.subr.mxu0 0.0
    %724 = vmatpush1.msra.mxu0 0.0
    %725 = vmatprep.subr.mxu0 0.0
    %726 = vmatpush1.msra.mxu0 0.0
    %727 = vmatprep.subr.mxu0 0.0
    %728 = vmatpush1.msra.mxu0 0.0
    %729 = vmatprep.subr.mxu0 0.0
    %730 = vmatpush1.msra.mxu0 0.0
    %731 = vmatprep.subr.mxu0 0.0
    %732 = vmatpush1.msra.mxu0 0.0
    %733 = vmatprep.subr.mxu0 0.0
    %734 = vmatpush1.msra.mxu0 0.0
    %735 = vmatprep.subr.mxu0 0.0
    %736 = vmatpush1.msra.mxu0 0.0
    %737 = vmatprep.subr.mxu0 0.0
    %738 = vmatpush1.msra.mxu0 0.0
    %739 = vmatprep.subr.mxu0 0.0
    %740 = vmatpush1.msra.mxu0 0.0
    %741 = vmatprep.subr.mxu0 0.0
    %742 = vmatpush1.msra.mxu0 0.0
    %743 = vmatprep.subr.mxu0 0.0
    %744 = vmatpush1.msra.mxu0 0.0
    %745 = vmatprep.subr.mxu0 0.0
    %746 = vmatpush1.msra.mxu0 %v710
    %747 = vmatprep.subr.mxu0 0.0
    %748 = vmatpush2.msra.mxu0 0.0
    %749 = vmatprep.subr.mxu0 0.0
    %750 = vmatpush2.msra.mxu0 0.0
    %751 = vmatprep.subr.mxu0 0.0
    %752 = vmatpush2.msra.mxu0 0.0
    %753 = vmatprep.subr.mxu0 0.0
    %754 = vmatpush2.msra.mxu0 0.0
    %755 = vmatprep.subr.mxu0 0.0
    %756 = vmatpush2.msra.mxu0 0.0
    %757 = vmatprep.subr.mxu0 0.0
    %758 = vmatpush2.msra.mxu0 0.0
    %759 = vmatprep.subr.mxu0 0.0
    %760 = vmatpush2.msra.mxu0 0.0
    %761 = vmatprep.subr.mxu0 0.0
    %762 = vmatpush2.msra.mxu0 0.0
    %763 = vmatprep.subr.mxu0 0.0
    %764 = vmatpush2.msra.mxu0 0.0
    %765 = vmatprep.subr.mxu0 0.0
    %766 = vmatpush2.msra.mxu0 0.0
    %767 = vmatprep.subr.mxu0 0.0
    %768 = vmatpush2.msra.mxu0 0.0
    %769 = vmatprep.subr.mxu0 0.0
    %770 = vmatpush2.msra.mxu0 0.0
    %771 = vmatprep.subr.mxu0 0.0
    %772 = vmatpush2.msra.mxu0 0.0
    %773 = vmatprep.subr.mxu0 0.0
    %774 = vmatpush2.msra.mxu0 0.0
    %775 = vmatprep.subr.mxu0 0.0
    %776 = vmatpush2.msra.mxu0 0.0
    %777 = vmatprep.subr.mxu0 0.0
    %778 = vmatpush2.msra.mxu0 0.0
    %779 = vmatprep.mubr.f32.mxu0 0.0
    %780 = vmatmul.mubr.f32.gmra.mxu0 %v713
    %v781 = vpop.f32.mrf.mxu0
    %v782 = vadd.f32 0.0, %v781
    %v783 = vpop.f32.mrf.mxu0
    %784 = vdwg.mxu0
    %s785 = scalar_lea.vmem %s2, 32
    %v786 = vld [vmem:[%s785] sm:$0xff]
    %v787 = vld [vmem:[%s785 + $0x8] sm:$0x1]
    %v789 = vsel %vm126, %v782, 0
    %v792 = vsel %vm296, %v787, 0
    %794 = vmatprep.subr.mxu0 0.0
    %795 = vmatpush1.msra.mxu0 0.0
    %796 = vmatprep.subr.mxu0 0.0
    %797 = vmatpush1.msra.mxu0 0.0
    %798 = vmatprep.subr.mxu0 0.0
    %799 = vmatpush1.msra.mxu0 0.0
    %800 = vmatprep.subr.mxu0 0.0
    %801 = vmatpush1.msra.mxu0 0.0
    %802 = vmatprep.subr.mxu0 0.0
    %803 = vmatpush1.msra.mxu0 0.0
    %804 = vmatprep.subr.mxu0 0.0
    %805 = vmatpush1.msra.mxu0 0.0
    %806 = vmatprep.subr.mxu0 0.0
    %807 = vmatpush1.msra.mxu0 0.0
    %808 = vmatprep.subr.mxu0 0.0
    %809 = vmatpush1.msra.mxu0 0.0
    %810 = vmatprep.subr.mxu0 0.0
    %811 = vmatpush1.msra.mxu0 0.0
    %812 = vmatprep.subr.mxu0 0.0
    %813 = vmatpush1.msra.mxu0 0.0
    %814 = vmatprep.subr.mxu0 0.0
    %815 = vmatpush1.msra.mxu0 0.0
    %816 = vmatprep.subr.mxu0 0.0
    %817 = vmatpush1.msra.mxu0 0.0
    %818 = vmatprep.subr.mxu0 0.0
    %819 = vmatpush1.msra.mxu0 0.0
    %820 = vmatprep.subr.mxu0 0.0
    %821 = vmatpush1.msra.mxu0 0.0
    %822 = vmatprep.subr.mxu0 0.0
    %823 = vmatpush1.msra.mxu0 %v792
    %824 = vmatprep.subr.mxu0 0.0
    %825 = vmatpush1.msra.mxu0 %v786
    %826 = vmatprep.subr.mxu0 0.0
    %827 = vmatpush2.msra.mxu0 0.0
    %828 = vmatprep.subr.mxu0 0.0
    %829 = vmatpush2.msra.mxu0 0.0
    %830 = vmatprep.subr.mxu0 0.0
    %831 = vmatpush2.msra.mxu0 0.0
    %832 = vmatprep.subr.mxu0 0.0
    %833 = vmatpush2.msra.mxu0 0.0
    %834 = vmatprep.subr.mxu0 0.0
    %835 = vmatpush2.msra.mxu0 0.0
    %836 = vmatprep.subr.mxu0 0.0
    %837 = vmatpush2.msra.mxu0 0.0
    %838 = vmatprep.subr.mxu0 0.0
    %839 = vmatpush2.msra.mxu0 0.0
    %840 = vmatprep.subr.mxu0 0.0
    %841 = vmatpush2.msra.mxu0 0.0
    %842 = vmatprep.subr.mxu0 0.0
    %843 = vmatpush2.msra.mxu0 0.0
    %844 = vmatprep.subr.mxu0 0.0
    %845 = vmatpush2.msra.mxu0 0.0
    %846 = vmatprep.subr.mxu0 0.0
    %847 = vmatpush2.msra.mxu0 0.0
    %848 = vmatprep.subr.mxu0 0.0
    %849 = vmatpush2.msra.mxu0 0.0
    %850 = vmatprep.subr.mxu0 0.0
    %851 = vmatpush2.msra.mxu0 0.0
    %852 = vmatprep.subr.mxu0 0.0
    %853 = vmatpush2.msra.mxu0 0.0
    %854 = vmatprep.subr.mxu0 0.0
    %855 = vmatpush2.msra.mxu0 0.0
    %856 = vmatprep.subr.mxu0 0.0
    %857 = vmatpush2.msra.mxu0 0.0
    %858 = vmatprep.mubr.f32.mxu0 0.0
    %859 = vmatmul.mubr.f32.gmra.mxu0 %v789
    %v860 = vpop.f32.mrf.mxu0
    %v861 = vadd.f32 0.0, %v860
    %v862 = vpop.f32.mrf.mxu0
    %863 = vdwg.mxu0
    %v864 = vadd.f32 %v617, %v861
    %865 = vst.msk [vmem:[#allocation2] sm:$0xff] %vm24, %v864
    %867 = vrot.lane.b32.xlu0 %v107, 101
    %v868 = vpop.permute.xlu0 %867
    %v869 = vsel %vm126, %v107, 0
    %v871 = vsel %vm126, %v868, 0
    %873 = vmatprep.subr.mxu0 0.0
    %874 = vmatpush1.xpose.msra.mxu0 0.0
    %875 = vmatprep.subr.mxu0 0.0
    %876 = vmatpush1.xpose.msra.mxu0 0.0
    %877 = vmatprep.subr.mxu0 0.0
    %878 = vmatpush1.xpose.msra.mxu0 0.0
    %879 = vmatprep.subr.mxu0 0.0
    %880 = vmatpush1.xpose.msra.mxu0 0.0
    %881 = vmatprep.subr.mxu0 0.0
    %882 = vmatpush1.xpose.msra.mxu0 0.0
    %883 = vmatprep.subr.mxu0 0.0
    %884 = vmatpush1.xpose.msra.mxu0 0.0
    %885 = vmatprep.subr.mxu0 0.0
    %886 = vmatpush1.xpose.msra.mxu0 0.0
    %887 = vmatprep.subr.mxu0 0.0
    %888 = vmatpush1.xpose.msra.mxu0 0.0
    %889 = vmatprep.subr.mxu0 0.0
    %890 = vmatpush1.xpose.msra.mxu0 0.0
    %891 = vmatprep.subr.mxu0 0.0
    %892 = vmatpush1.xpose.msra.mxu0 0.0
    %893 = vmatprep.subr.mxu0 0.0
    %894 = vmatpush1.xpose.msra.mxu0 0.0
    %895 = vmatprep.subr.mxu0 0.0
    %896 = vmatpush1.xpose.msra.mxu0 0.0
    %897 = vmatprep.subr.mxu0 0.0
    %898 = vmatpush1.xpose.msra.mxu0 0.0
    %899 = vmatprep.subr.mxu0 0.0
    %900 = vmatpush1.xpose.msra.mxu0 0.0
    %901 = vmatprep.subr.mxu0 0.0
    %902 = vmatpush1.xpose.msra.mxu0 0.0
    %903 = vmatprep.subr.mxu0 0.0
    %904 = vmatpush1.xpose.msra.mxu0 %v871
    %905 = vmatprep.subr.mxu0 0.0
    %906 = vmatpush2.xpose.msra.mxu0 0.0
    %907 = vmatprep.subr.mxu0 0.0
    %908 = vmatpush2.xpose.msra.mxu0 0.0
    %909 = vmatprep.subr.mxu0 0.0
    %910 = vmatpush2.xpose.msra.mxu0 0.0
    %911 = vmatprep.subr.mxu0 0.0
    %912 = vmatpush2.xpose.msra.mxu0 0.0
    %913 = vmatprep.subr.mxu0 0.0
    %914 = vmatpush2.xpose.msra.mxu0 0.0
    %915 = vmatprep.subr.mxu0 0.0
    %916 = vmatpush2.xpose.msra.mxu0 0.0
    %917 = vmatprep.subr.mxu0 0.0
    %918 = vmatpush2.xpose.msra.mxu0 0.0
    %919 = vmatprep.subr.mxu0 0.0
    %920 = vmatpush2.xpose.msra.mxu0 0.0
    %921 = vmatprep.subr.mxu0 0.0
    %922 = vmatpush2.xpose.msra.mxu0 0.0
    %923 = vmatprep.subr.mxu0 0.0
    %924 = vmatpush2.xpose.msra.mxu0 0.0
    %925 = vmatprep.subr.mxu0 0.0
    %926 = vmatpush2.xpose.msra.mxu0 0.0
    %927 = vmatprep.subr.mxu0 0.0
    %928 = vmatpush2.xpose.msra.mxu0 0.0
    %929 = vmatprep.subr.mxu0 0.0
    %930 = vmatpush2.xpose.msra.mxu0 0.0
    %931 = vmatprep.subr.mxu0 0.0
    %932 = vmatpush2.xpose.msra.mxu0 0.0
    %933 = vmatprep.subr.mxu0 0.0
    %934 = vmatpush2.xpose.msra.mxu0 0.0
    %935 = vmatprep.subr.mxu0 0.0
    %936 = vmatpush2.xpose.msra.mxu0 0.0
    %937 = vmatprep.mubr.f32.mxu0 0.0
    %938 = vmatmul.mubr.f32.gmra.mxu0 %v869
    %v939 = vpop.f32.mrf.mxu0
    %v940 = vadd.f32 0.0, %v939
    %v941 = vpop.f32.mrf.mxu0
    %942 = vdwg.mxu0
    %v943 = vmul.f32 %v940, 0.33333334
    %v944 = vadd.f32 %v943, %v115
    %v945 = vsel %vm203, %v944, -inf
    %946 = vmax.xlane.f32.xlu0 %v945
    %v947 = vpop.xlane.xlu0 %946
    %v948 = vsub.f32 %v944, %v947
    %v949 = vmul.f32 %v948, 1.442695
    %v950 = vpow.pop %v949
    %v951 = vsel %vm203, %v950, 0.0
    %952 = vadd.xlane.f32.xlu0 %v951
    %v953 = vpop.xlane.xlu0 %952
    %v954 = vrcp.pop %v953
    %v955 = vmul.f32 %v950, %v954
    %956 = vrot.lane.b32.xlu0 %v107, 74
    %v957 = vpop.permute.xlu0 %956
    %v960 = vsel %vm203, %v955, 0
    %962 = vmatprep.subr.mxu0 0.0
    %963 = vmatpush1.msra.mxu0 0.0
    %964 = vmatprep.subr.mxu0 0.0
    %965 = vmatpush1.msra.mxu0 0.0
    %966 = vmatprep.subr.mxu0 0.0
    %967 = vmatpush1.msra.mxu0 0.0
    %968 = vmatprep.subr.mxu0 0.0
    %969 = vmatpush1.msra.mxu0 0.0
    %970 = vmatprep.subr.mxu0 0.0
    %971 = vmatpush1.msra.mxu0 0.0
    %972 = vmatprep.subr.mxu0 0.0
    %973 = vmatpush1.msra.mxu0 0.0
    %974 = vmatprep.subr.mxu0 0.0
    %975 = vmatpush1.msra.mxu0 0.0
    %976 = vmatprep.subr.mxu0 0.0
    %977 = vmatpush1.msra.mxu0 0.0
    %978 = vmatprep.subr.mxu0 0.0
    %979 = vmatpush1.msra.mxu0 0.0
    %980 = vmatprep.subr.mxu0 0.0
    %981 = vmatpush1.msra.mxu0 0.0
    %982 = vmatprep.subr.mxu0 0.0
    %983 = vmatpush1.msra.mxu0 0.0
    %984 = vmatprep.subr.mxu0 0.0
    %985 = vmatpush1.msra.mxu0 0.0
    %986 = vmatprep.subr.mxu0 0.0
    %987 = vmatpush1.msra.mxu0 0.0
    %988 = vmatprep.subr.mxu0 0.0
    %989 = vmatpush1.msra.mxu0 0.0
    %990 = vmatprep.subr.mxu0 0.0
    %991 = vmatpush1.msra.mxu0 0.0
    %992 = vmatprep.subr.mxu0 0.0
    %993 = vmatpush1.msra.mxu0 %v957
    %994 = vmatprep.subr.mxu0 0.0
    %995 = vmatpush2.msra.mxu0 0.0
    %996 = vmatprep.subr.mxu0 0.0
    %997 = vmatpush2.msra.mxu0 0.0
    %998 = vmatprep.subr.mxu0 0.0
    %999 = vmatpush2.msra.mxu0 0.0
    %1000 = vmatprep.subr.mxu0 0.0
    %1001 = vmatpush2.msra.mxu0 0.0
    %1002 = vmatprep.subr.mxu0 0.0
    %1003 = vmatpush2.msra.mxu0 0.0
    %1004 = vmatprep.subr.mxu0 0.0
    %1005 = vmatpush2.msra.mxu0 0.0
    %1006 = vmatprep.subr.mxu0 0.0
    %1007 = vmatpush2.msra.mxu0 0.0
    %1008 = vmatprep.subr.mxu0 0.0
    %1009 = vmatpush2.msra.mxu0 0.0
    %1010 = vmatprep.subr.mxu0 0.0
    %1011 = vmatpush2.msra.mxu0 0.0
    %1012 = vmatprep.subr.mxu0 0.0
    %1013 = vmatpush2.msra.mxu0 0.0
    %1014 = vmatprep.subr.mxu0 0.0
    %1015 = vmatpush2.msra.mxu0 0.0
    %1016 = vmatprep.subr.mxu0 0.0
    %1017 = vmatpush2.msra.mxu0 0.0
    %1018 = vmatprep.subr.mxu0 0.0
    %1019 = vmatpush2.msra.mxu0 0.0
    %1020 = vmatprep.subr.mxu0 0.0
    %1021 = vmatpush2.msra.mxu0 0.0
    %1022 = vmatprep.subr.mxu0 0.0
    %1023 = vmatpush2.msra.mxu0 0.0
    %1024 = vmatprep.subr.mxu0 0.0
    %1025 = vmatpush2.msra.mxu0 0.0
    %1026 = vmatprep.mubr.f32.mxu0 0.0
    %1027 = vmatmul.mubr.f32.gmra.mxu0 %v960
    %v1028 = vpop.f32.mrf.mxu0
    %v1029 = vadd.f32 0.0, %v1028
    %v1030 = vpop.f32.mrf.mxu0
    %1031 = vdwg.mxu0
    %v1032 = vld [vmem:[%s2] sm:$0xff]
    %v1033 = vld [vmem:[%s2 + $0x8] sm:$0x1]
    %v1035 = vsel %vm126, %v1029, 0
    %v1038 = vsel %vm296, %v1033, 0
    %1040 = vmatprep.subr.mxu0 0.0
    %1041 = vmatpush1.msra.mxu0 0.0
    %1042 = vmatprep.subr.mxu0 0.0
    %1043 = vmatpush1.msra.mxu0 0.0
    %1044 = vmatprep.subr.mxu0 0.0
    %1045 = vmatpush1.msra.mxu0 0.0
    %1046 = vmatprep.subr.mxu0 0.0
    %1047 = vmatpush1.msra.mxu0 0.0
    %1048 = vmatprep.subr.mxu0 0.0
    %1049 = vmatpush1.msra.mxu0 0.0
    %1050 = vmatprep.subr.mxu0 0.0
    %1051 = vmatpush1.msra.mxu0 0.0
    %1052 = vmatprep.subr.mxu0 0.0
    %1053 = vmatpush1.msra.mxu0 0.0
    %1054 = vmatprep.subr.mxu0 0.0
    %1055 = vmatpush1.msra.mxu0 0.0
    %1056 = vmatprep.subr.mxu0 0.0
    %1057 = vmatpush1.msra.mxu0 0.0
    %1058 = vmatprep.subr.mxu0 0.0
    %1059 = vmatpush1.msra.mxu0 0.0
    %1060 = vmatprep.subr.mxu0 0.0
    %1061 = vmatpush1.msra.mxu0 0.0
    %1062 = vmatprep.subr.mxu0 0.0
    %1063 = vmatpush1.msra.mxu0 0.0
    %1064 = vmatprep.subr.mxu0 0.0
    %1065 = vmatpush1.msra.mxu0 0.0
    %1066 = vmatprep.subr.mxu0 0.0
    %1067 = vmatpush1.msra.mxu0 0.0
    %1068 = vmatprep.subr.mxu0 0.0
    %1069 = vmatpush1.msra.mxu0 %v1038
    %1070 = vmatprep.subr.mxu0 0.0
    %1071 = vmatpush1.msra.mxu0 %v1032
    %1072 = vmatprep.subr.mxu0 0.0
    %1073 = vmatpush2.msra.mxu0 0.0
    %1074 = vmatprep.subr.mxu0 0.0
    %1075 = vmatpush2.msra.mxu0 0.0
    %1076 = vmatprep.subr.mxu0 0.0
    %1077 = vmatpush2.msra.mxu0 0.0
    %1078 = vmatprep.subr.mxu0 0.0
    %1079 = vmatpush2.msra.mxu0 0.0
    %1080 = vmatprep.subr.mxu0 0.0
    %1081 = vmatpush2.msra.mxu0 0.0
    %1082 = vmatprep.subr.mxu0 0.0
    %1083 = vmatpush2.msra.mxu0 0.0
    %1084 = vmatprep.subr.mxu0 0.0
    %1085 = vmatpush2.msra.mxu0 0.0
    %1086 = vmatprep.subr.mxu0 0.0
    %1087 = vmatpush2.msra.mxu0 0.0
    %1088 = vmatprep.subr.mxu0 0.0
    %1089 = vmatpush2.msra.mxu0 0.0
    %1090 = vmatprep.subr.mxu0 0.0
    %1091 = vmatpush2.msra.mxu0 0.0
    %1092 = vmatprep.subr.mxu0 0.0
    %1093 = vmatpush2.msra.mxu0 0.0
    %1094 = vmatprep.subr.mxu0 0.0
    %1095 = vmatpush2.msra.mxu0 0.0
    %1096 = vmatprep.subr.mxu0 0.0
    %1097 = vmatpush2.msra.mxu0 0.0
    %1098 = vmatprep.subr.mxu0 0.0
    %1099 = vmatpush2.msra.mxu0 0.0
    %1100 = vmatprep.subr.mxu0 0.0
    %1101 = vmatpush2.msra.mxu0 0.0
    %1102 = vmatprep.subr.mxu0 0.0
    %1103 = vmatpush2.msra.mxu0 0.0
    %1104 = vmatprep.mubr.f32.mxu0 0.0
    %1105 = vmatmul.mubr.f32.gmra.mxu0 %v1035
    %v1106 = vpop.f32.mrf.mxu0
    %v1107 = vadd.f32 0.0, %v1106
    %v1108 = vpop.f32.mrf.mxu0
    %1109 = vdwg.mxu0
    %v1110 = vadd.f32 %v121, %v1107
    %1111 = vrot.lane.b32.xlu0 %v107, 119
    %v1112 = vpop.permute.xlu0 %1111
    %1113 = vrot.lane.b32.xlu0 %v107, 92
    %v1114 = vpop.permute.xlu0 %1113
    %v1115 = vsel %vm126, %v1112, 0
    %v1117 = vsel %vm126, %v1114, 0
    %1119 = vmatprep.subr.mxu0 0.0
    %1120 = vmatpush1.xpose.msra.mxu0 0.0
    %1121 = vmatprep.subr.mxu0 0.0
    %1122 = vmatpush1.xpose.msra.mxu0 0.0
    %1123 = vmatprep.subr.mxu0 0.0
    %1124 = vmatpush1.xpose.msra.mxu0 0.0
    %1125 = vmatprep.subr.mxu0 0.0
    %1126 = vmatpush1.xpose.msra.mxu0 0.0
    %1127 = vmatprep.subr.mxu0 0.0
    %1128 = vmatpush1.xpose.msra.mxu0 0.0
    %1129 = vmatprep.subr.mxu0 0.0
    %1130 = vmatpush1.xpose.msra.mxu0 0.0
    %1131 = vmatprep.subr.mxu0 0.0
    %1132 = vmatpush1.xpose.msra.mxu0 0.0
    %1133 = vmatprep.subr.mxu0 0.0
    %1134 = vmatpush1.xpose.msra.mxu0 0.0
    %1135 = vmatprep.subr.mxu0 0.0
    %1136 = vmatpush1.xpose.msra.mxu0 0.0
    %1137 = vmatprep.subr.mxu0 0.0
    %1138 = vmatpush1.xpose.msra.mxu0 0.0
    %1139 = vmatprep.subr.mxu0 0.0
    %1140 = vmatpush1.xpose.msra.mxu0 0.0
    %1141 = vmatprep.subr.mxu0 0.0
    %1142 = vmatpush1.xpose.msra.mxu0 0.0
    %1143 = vmatprep.subr.mxu0 0.0
    %1144 = vmatpush1.xpose.msra.mxu0 0.0
    %1145 = vmatprep.subr.mxu0 0.0
    %1146 = vmatpush1.xpose.msra.mxu0 0.0
    %1147 = vmatprep.subr.mxu0 0.0
    %1148 = vmatpush1.xpose.msra.mxu0 0.0
    %1149 = vmatprep.subr.mxu0 0.0
    %1150 = vmatpush1.xpose.msra.mxu0 %v1117
    %1151 = vmatprep.subr.mxu0 0.0
    %1152 = vmatpush2.xpose.msra.mxu0 0.0
    %1153 = vmatprep.subr.mxu0 0.0
    %1154 = vmatpush2.xpose.msra.mxu0 0.0
    %1155 = vmatprep.subr.mxu0 0.0
    %1156 = vmatpush2.xpose.msra.mxu0 0.0
    %1157 = vmatprep.subr.mxu0 0.0
    %1158 = vmatpush2.xpose.msra.mxu0 0.0
    %1159 = vmatprep.subr.mxu0 0.0
    %1160 = vmatpush2.xpose.msra.mxu0 0.0
    %1161 = vmatprep.subr.mxu0 0.0
    %1162 = vmatpush2.xpose.msra.mxu0 0.0
    %1163 = vmatprep.subr.mxu0 0.0
    %1164 = vmatpush2.xpose.msra.mxu0 0.0
    %1165 = vmatprep.subr.mxu0 0.0
    %1166 = vmatpush2.xpose.msra.mxu0 0.0
    %1167 = vmatprep.subr.mxu0 0.0
    %1168 = vmatpush2.xpose.msra.mxu0 0.0
    %1169 = vmatprep.subr.mxu0 0.0
    %1170 = vmatpush2.xpose.msra.mxu0 0.0
    %1171 = vmatprep.subr.mxu0 0.0
    %1172 = vmatpush2.xpose.msra.mxu0 0.0
    %1173 = vmatprep.subr.mxu0 0.0
    %1174 = vmatpush2.xpose.msra.mxu0 0.0
    %1175 = vmatprep.subr.mxu0 0.0
    %1176 = vmatpush2.xpose.msra.mxu0 0.0
    %1177 = vmatprep.subr.mxu0 0.0
    %1178 = vmatpush2.xpose.msra.mxu0 0.0
    %1179 = vmatprep.subr.mxu0 0.0
    %1180 = vmatpush2.xpose.msra.mxu0 0.0
    %1181 = vmatprep.subr.mxu0 0.0
    %1182 = vmatpush2.xpose.msra.mxu0 0.0
    %1183 = vmatprep.mubr.f32.mxu0 0.0
    %1184 = vmatmul.mubr.f32.gmra.mxu0 %v1115
    %v1185 = vpop.f32.mrf.mxu0
    %v1186 = vadd.f32 0.0, %v1185
    %v1187 = vpop.f32.mrf.mxu0
    %1188 = vdwg.mxu0
    %v1189 = vmul.f32 %v1186, 0.33333334
    %v1190 = vadd.f32 %v1189, %v115
    %v1191 = vsel %vm203, %v1190, -inf
    %1192 = vmax.xlane.f32.xlu0 %v1191
    %v1193 = vpop.xlane.xlu0 %1192
    %v1194 = vsub.f32 %v1190, %v1193
    %v1195 = vmul.f32 %v1194, 1.442695
    %v1196 = vpow.pop %v1195
    %v1197 = vsel %vm203, %v1196, 0.0
    %1198 = vadd.xlane.f32.xlu0 %v1197
    %v1199 = vpop.xlane.xlu0 %1198
    %v1200 = vrcp.pop %v1199
    %v1201 = vmul.f32 %v1196, %v1200
    %1202 = vrot.lane.b32.xlu0 %v107, 65
    %v1203 = vpop.permute.xlu0 %1202
    %v1206 = vsel %vm203, %v1201, 0
    %1208 = vmatprep.subr.mxu0 0.0
    %1209 = vmatpush1.msra.mxu0 0.0
    %1210 = vmatprep.subr.mxu0 0.0
    %1211 = vmatpush1.msra.mxu0 0.0
    %1212 = vmatprep.subr.mxu0 0.0
    %1213 = vmatpush1.msra.mxu0 0.0
    %1214 = vmatprep.subr.mxu0 0.0
    %1215 = vmatpush1.msra.mxu0 0.0
    %1216 = vmatprep.subr.mxu0 0.0
    %1217 = vmatpush1.msra.mxu0 0.0
    %1218 = vmatprep.subr.mxu0 0.0
    %1219 = vmatpush1.msra.mxu0 0.0
    %1220 = vmatprep.subr.mxu0 0.0
    %1221 = vmatpush1.msra.mxu0 0.0
    %1222 = vmatprep.subr.mxu0 0.0
    %1223 = vmatpush1.msra.mxu0 0.0
    %1224 = vmatprep.subr.mxu0 0.0
    %1225 = vmatpush1.msra.mxu0 0.0
    %1226 = vmatprep.subr.mxu0 0.0
    %1227 = vmatpush1.msra.mxu0 0.0
    %1228 = vmatprep.subr.mxu0 0.0
    %1229 = vmatpush1.msra.mxu0 0.0
    %1230 = vmatprep.subr.mxu0 0.0
    %1231 = vmatpush1.msra.mxu0 0.0
    %1232 = vmatprep.subr.mxu0 0.0
    %1233 = vmatpush1.msra.mxu0 0.0
    %1234 = vmatprep.subr.mxu0 0.0
    %1235 = vmatpush1.msra.mxu0 0.0
    %1236 = vmatprep.subr.mxu0 0.0
    %1237 = vmatpush1.msra.mxu0 0.0
    %1238 = vmatprep.subr.mxu0 0.0
    %1239 = vmatpush1.msra.mxu0 %v1203
    %1240 = vmatprep.subr.mxu0 0.0
    %1241 = vmatpush2.msra.mxu0 0.0
    %1242 = vmatprep.subr.mxu0 0.0
    %1243 = vmatpush2.msra.mxu0 0.0
    %1244 = vmatprep.subr.mxu0 0.0
    %1245 = vmatpush2.msra.mxu0 0.0
    %1246 = vmatprep.subr.mxu0 0.0
    %1247 = vmatpush2.msra.mxu0 0.0
    %1248 = vmatprep.subr.mxu0 0.0
    %1249 = vmatpush2.msra.mxu0 0.0
    %1250 = vmatprep.subr.mxu0 0.0
    %1251 = vmatpush2.msra.mxu0 0.0
    %1252 = vmatprep.subr.mxu0 0.0
    %1253 = vmatpush2.msra.mxu0 0.0
    %1254 = vmatprep.subr.mxu0 0.0
    %1255 = vmatpush2.msra.mxu0 0.0
    %1256 = vmatprep.subr.mxu0 0.0
    %1257 = vmatpush2.msra.mxu0 0.0
    %1258 = vmatprep.subr.mxu0 0.0
    %1259 = vmatpush2.msra.mxu0 0.0
    %1260 = vmatprep.subr.mxu0 0.0
    %1261 = vmatpush2.msra.mxu0 0.0
    %1262 = vmatprep.subr.mxu0 0.0
    %1263 = vmatpush2.msra.mxu0 0.0
    %1264 = vmatprep.subr.mxu0 0.0
    %1265 = vmatpush2.msra.mxu0 0.0
    %1266 = vmatprep.subr.mxu0 0.0
    %1267 = vmatpush2.msra.mxu0 0.0
    %1268 = vmatprep.subr.mxu0 0.0
    %1269 = vmatpush2.msra.mxu0 0.0
    %1270 = vmatprep.subr.mxu0 0.0
    %1271 = vmatpush2.msra.mxu0 0.0
    %1272 = vmatprep.mubr.f32.mxu0 0.0
    %1273 = vmatmul.mubr.f32.gmra.mxu0 %v1206
    %v1274 = vpop.f32.mrf.mxu0
    %v1275 = vadd.f32 0.0, %v1274
    %v1276 = vpop.f32.mrf.mxu0
    %1277 = vdwg.mxu0
    %v1278 = vld [vmem:[%s538] sm:$0xff]
    %v1279 = vld [vmem:[%s538 + $0x8] sm:$0x1]
    %v1281 = vsel %vm126, %v1275, 0
    %v1284 = vsel %vm296, %v1279, 0
    %1286 = vmatprep.subr.mxu0 0.0
    %1287 = vmatpush1.msra.mxu0 0.0
    %1288 = vmatprep.subr.mxu0 0.0
    %1289 = vmatpush1.msra.mxu0 0.0
    %1290 = vmatprep.subr.mxu0 0.0
    %1291 = vmatpush1.msra.mxu0 0.0
    %1292 = vmatprep.subr.mxu0 0.0
    %1293 = vmatpush1.msra.mxu0 0.0
    %1294 = vmatprep.subr.mxu0 0.0
    %1295 = vmatpush1.msra.mxu0 0.0
    %1296 = vmatprep.subr.mxu0 0.0
    %1297 = vmatpush1.msra.mxu0 0.0
    %1298 = vmatprep.subr.mxu0 0.0
    %1299 = vmatpush1.msra.mxu0 0.0
    %1300 = vmatprep.subr.mxu0 0.0
    %1301 = vmatpush1.msra.mxu0 0.0
    %1302 = vmatprep.subr.mxu0 0.0
    %1303 = vmatpush1.msra.mxu0 0.0
    %1304 = vmatprep.subr.mxu0 0.0
    %1305 = vmatpush1.msra.mxu0 0.0
    %1306 = vmatprep.subr.mxu0 0.0
    %1307 = vmatpush1.msra.mxu0 0.0
    %1308 = vmatprep.subr.mxu0 0.0
    %1309 = vmatpush1.msra.mxu0 0.0
    %1310 = vmatprep.subr.mxu0 0.0
    %1311 = vmatpush1.msra.mxu0 0.0
    %1312 = vmatprep.subr.mxu0 0.0
    %1313 = vmatpush1.msra.mxu0 0.0
    %1314 = vmatprep.subr.mxu0 0.0
    %1315 = vmatpush1.msra.mxu0 %v1284
    %1316 = vmatprep.subr.mxu0 0.0
    %1317 = vmatpush1.msra.mxu0 %v1278
    %1318 = vmatprep.subr.mxu0 0.0
    %1319 = vmatpush2.msra.mxu0 0.0
    %1320 = vmatprep.subr.mxu0 0.0
    %1321 = vmatpush2.msra.mxu0 0.0
    %1322 = vmatprep.subr.mxu0 0.0
    %1323 = vmatpush2.msra.mxu0 0.0
    %1324 = vmatprep.subr.mxu0 0.0
    %1325 = vmatpush2.msra.mxu0 0.0
    %1326 = vmatprep.subr.mxu0 0.0
    %1327 = vmatpush2.msra.mxu0 0.0
    %1328 = vmatprep.subr.mxu0 0.0
    %1329 = vmatpush2.msra.mxu0 0.0
    %1330 = vmatprep.subr.mxu0 0.0
    %1331 = vmatpush2.msra.mxu0 0.0
    %1332 = vmatprep.subr.mxu0 0.0
    %1333 = vmatpush2.msra.mxu0 0.0
    %1334 = vmatprep.subr.mxu0 0.0
    %1335 = vmatpush2.msra.mxu0 0.0
    %1336 = vmatprep.subr.mxu0 0.0
    %1337 = vmatpush2.msra.mxu0 0.0
    %1338 = vmatprep.subr.mxu0 0.0
    %1339 = vmatpush2.msra.mxu0 0.0
    %1340 = vmatprep.subr.mxu0 0.0
    %1341 = vmatpush2.msra.mxu0 0.0
    %1342 = vmatprep.subr.mxu0 0.0
    %1343 = vmatpush2.msra.mxu0 0.0
    %1344 = vmatprep.subr.mxu0 0.0
    %1345 = vmatpush2.msra.mxu0 0.0
    %1346 = vmatprep.subr.mxu0 0.0
    %1347 = vmatpush2.msra.mxu0 0.0
    %1348 = vmatprep.subr.mxu0 0.0
    %1349 = vmatpush2.msra.mxu0 0.0
    %1350 = vmatprep.mubr.f32.mxu0 0.0
    %1351 = vmatmul.mubr.f32.gmra.mxu0 %v1281
    %v1352 = vpop.f32.mrf.mxu0
    %v1353 = vadd.f32 0.0, %v1352
    %v1354 = vpop.f32.mrf.mxu0
    %1355 = vdwg.mxu0
    %v1356 = vadd.f32 %v1110, %v1353
    %1357 = vrot.lane.b32.xlu0 %v107, 110
    %v1358 = vpop.permute.xlu0 %1357
    %1359 = vrot.lane.b32.xlu0 %v107, 83
    %v1360 = vpop.permute.xlu0 %1359
    %v1361 = vsel %vm126, %v1358, 0
    %v1363 = vsel %vm126, %v1360, 0
    %1365 = vmatprep.subr.mxu0 0.0
    %1366 = vmatpush1.xpose.msra.mxu0 0.0
    %1367 = vmatprep.subr.mxu0 0.0
    %1368 = vmatpush1.xpose.msra.mxu0 0.0
    %1369 = vmatprep.subr.mxu0 0.0
    %1370 = vmatpush1.xpose.msra.mxu0 0.0
    %1371 = vmatprep.subr.mxu0 0.0
    %1372 = vmatpush1.xpose.msra.mxu0 0.0
    %1373 = vmatprep.subr.mxu0 0.0
    %1374 = vmatpush1.xpose.msra.mxu0 0.0
    %1375 = vmatprep.subr.mxu0 0.0
    %1376 = vmatpush1.xpose.msra.mxu0 0.0
    %1377 = vmatprep.subr.mxu0 0.0
    %1378 = vmatpush1.xpose.msra.mxu0 0.0
    %1379 = vmatprep.subr.mxu0 0.0
    %1380 = vmatpush1.xpose.msra.mxu0 0.0
    %1381 = vmatprep.subr.mxu0 0.0
    %1382 = vmatpush1.xpose.msra.mxu0 0.0
    %1383 = vmatprep.subr.mxu0 0.0
    %1384 = vmatpush1.xpose.msra.mxu0 0.0
    %1385 = vmatprep.subr.mxu0 0.0
    %1386 = vmatpush1.xpose.msra.mxu0 0.0
    %1387 = vmatprep.subr.mxu0 0.0
    %1388 = vmatpush1.xpose.msra.mxu0 0.0
    %1389 = vmatprep.subr.mxu0 0.0
    %1390 = vmatpush1.xpose.msra.mxu0 0.0
    %1391 = vmatprep.subr.mxu0 0.0
    %1392 = vmatpush1.xpose.msra.mxu0 0.0
    %1393 = vmatprep.subr.mxu0 0.0
    %1394 = vmatpush1.xpose.msra.mxu0 0.0
    %1395 = vmatprep.subr.mxu0 0.0
    %1396 = vmatpush1.xpose.msra.mxu0 %v1363
    %1397 = vmatprep.subr.mxu0 0.0
    %1398 = vmatpush2.xpose.msra.mxu0 0.0
    %1399 = vmatprep.subr.mxu0 0.0
    %1400 = vmatpush2.xpose.msra.mxu0 0.0
    %1401 = vmatprep.subr.mxu0 0.0
    %1402 = vmatpush2.xpose.msra.mxu0 0.0
    %1403 = vmatprep.subr.mxu0 0.0
    %1404 = vmatpush2.xpose.msra.mxu0 0.0
    %1405 = vmatprep.subr.mxu0 0.0
    %1406 = vmatpush2.xpose.msra.mxu0 0.0
    %1407 = vmatprep.subr.mxu0 0.0
    %1408 = vmatpush2.xpose.msra.mxu0 0.0
    %1409 = vmatprep.subr.mxu0 0.0
    %1410 = vmatpush2.xpose.msra.mxu0 0.0
    %1411 = vmatprep.subr.mxu0 0.0
    %1412 = vmatpush2.xpose.msra.mxu0 0.0
    %1413 = vmatprep.subr.mxu0 0.0
    %1414 = vmatpush2.xpose.msra.mxu0 0.0
    %1415 = vmatprep.subr.mxu0 0.0
    %1416 = vmatpush2.xpose.msra.mxu0 0.0
    %1417 = vmatprep.subr.mxu0 0.0
    %1418 = vmatpush2.xpose.msra.mxu0 0.0
    %1419 = vmatprep.subr.mxu0 0.0
    %1420 = vmatpush2.xpose.msra.mxu0 0.0
    %1421 = vmatprep.subr.mxu0 0.0
    %1422 = vmatpush2.xpose.msra.mxu0 0.0
    %1423 = vmatprep.subr.mxu0 0.0
    %1424 = vmatpush2.xpose.msra.mxu0 0.0
    %1425 = vmatprep.subr.mxu0 0.0
    %1426 = vmatpush2.xpose.msra.mxu0 0.0
    %1427 = vmatprep.subr.mxu0 0.0
    %1428 = vmatpush2.xpose.msra.mxu0 0.0
    %1429 = vmatprep.mubr.f32.mxu0 0.0
    %1430 = vmatmul.mubr.f32.gmra.mxu0 %v1361
    %v1431 = vpop.f32.mrf.mxu0
    %v1432 = vadd.f32 0.0, %v1431
    %v1433 = vpop.f32.mrf.mxu0
    %1434 = vdwg.mxu0
    %v1435 = vmul.f32 %v1432, 0.33333334
    %v1436 = vadd.f32 %v1435, %v115
    %v1437 = vsel %vm203, %v1436, -inf
    %1438 = vmax.xlane.f32.xlu0 %v1437
    %v1439 = vpop.xlane.xlu0 %1438
    %v1440 = vsub.f32 %v1436, %v1439
    %v1441 = vmul.f32 %v1440, 1.442695
    %v1442 = vpow.pop %v1441
    %v1443 = vsel %vm203, %v1442, 0.0
    %1444 = vadd.xlane.f32.xlu0 %v1443
    %v1445 = vpop.xlane.xlu0 %1444
    %v1446 = vrcp.pop %v1445
    %v1447 = vmul.f32 %v1442, %v1446
    %1448 = vrot.lane.b32.xlu0 %v107, 56
    %v1449 = vpop.permute.xlu0 %1448
    %v1452 = vsel %vm203, %v1447, 0
    %1454 = vmatprep.subr.mxu0 0.0
    %1455 = vmatpush1.msra.mxu0 0.0
    %1456 = vmatprep.subr.mxu0 0.0
    %1457 = vmatpush1.msra.mxu0 0.0
    %1458 = vmatprep.subr.mxu0 0.0
    %1459 = vmatpush1.msra.mxu0 0.0
    %1460 = vmatprep.subr.mxu0 0.0
    %1461 = vmatpush1.msra.mxu0 0.0
    %1462 = vmatprep.subr.mxu0 0.0
    %1463 = vmatpush1.msra.mxu0 0.0
    %1464 = vmatprep.subr.mxu0 0.0
    %1465 = vmatpush1.msra.mxu0 0.0
    %1466 = vmatprep.subr.mxu0 0.0
    %1467 = vmatpush1.msra.mxu0 0.0
    %1468 = vmatprep.subr.mxu0 0.0
    %1469 = vmatpush1.msra.mxu0 0.0
    %1470 = vmatprep.subr.mxu0 0.0
    %1471 = vmatpush1.msra.mxu0 0.0
    %1472 = vmatprep.subr.mxu0 0.0
    %1473 = vmatpush1.msra.mxu0 0.0
    %1474 = vmatprep.subr.mxu0 0.0
    %1475 = vmatpush1.msra.mxu0 0.0
    %1476 = vmatprep.subr.mxu0 0.0
    %1477 = vmatpush1.msra.mxu0 0.0
    %1478 = vmatprep.subr.mxu0 0.0
    %1479 = vmatpush1.msra.mxu0 0.0
    %1480 = vmatprep.subr.mxu0 0.0
    %1481 = vmatpush1.msra.mxu0 0.0
    %1482 = vmatprep.subr.mxu0 0.0
    %1483 = vmatpush1.msra.mxu0 0.0
    %1484 = vmatprep.subr.mxu0 0.0
    %1485 = vmatpush1.msra.mxu0 %v1449
    %1486 = vmatprep.subr.mxu0 0.0
    %1487 = vmatpush2.msra.mxu0 0.0
    %1488 = vmatprep.subr.mxu0 0.0
    %1489 = vmatpush2.msra.mxu0 0.0
    %1490 = vmatprep.subr.mxu0 0.0
    %1491 = vmatpush2.msra.mxu0 0.0
    %1492 = vmatprep.subr.mxu0 0.0
    %1493 = vmatpush2.msra.mxu0 0.0
    %1494 = vmatprep.subr.mxu0 0.0
    %1495 = vmatpush2.msra.mxu0 0.0
    %1496 = vmatprep.subr.mxu0 0.0
    %1497 = vmatpush2.msra.mxu0 0.0
    %1498 = vmatprep.subr.mxu0 0.0
    %1499 = vmatpush2.msra.mxu0 0.0
    %1500 = vmatprep.subr.mxu0 0.0
    %1501 = vmatpush2.msra.mxu0 0.0
    %1502 = vmatprep.subr.mxu0 0.0
    %1503 = vmatpush2.msra.mxu0 0.0
    %1504 = vmatprep.subr.mxu0 0.0
    %1505 = vmatpush2.msra.mxu0 0.0
    %1506 = vmatprep.subr.mxu0 0.0
    %1507 = vmatpush2.msra.mxu0 0.0
    %1508 = vmatprep.subr.mxu0 0.0
    %1509 = vmatpush2.msra.mxu0 0.0
    %1510 = vmatprep.subr.mxu0 0.0
    %1511 = vmatpush2.msra.mxu0 0.0
    %1512 = vmatprep.subr.mxu0 0.0
    %1513 = vmatpush2.msra.mxu0 0.0
    %1514 = vmatprep.subr.mxu0 0.0
    %1515 = vmatpush2.msra.mxu0 0.0
    %1516 = vmatprep.subr.mxu0 0.0
    %1517 = vmatpush2.msra.mxu0 0.0
    %1518 = vmatprep.mubr.f32.mxu0 0.0
    %1519 = vmatmul.mubr.f32.gmra.mxu0 %v1452
    %v1520 = vpop.f32.mrf.mxu0
    %v1521 = vadd.f32 0.0, %v1520
    %v1522 = vpop.f32.mrf.mxu0
    %1523 = vdwg.mxu0
    %v1524 = vld [vmem:[%s785] sm:$0xff]
    %v1525 = vld [vmem:[%s785 + $0x8] sm:$0x1]
    %v1527 = vsel %vm126, %v1521, 0
    %v1530 = vsel %vm296, %v1525, 0
    %1532 = vmatprep.subr.mxu0 0.0
    %1533 = vmatpush1.msra.mxu0 0.0
    %1534 = vmatprep.subr.mxu0 0.0
    %1535 = vmatpush1.msra.mxu0 0.0
    %1536 = vmatprep.subr.mxu0 0.0
    %1537 = vmatpush1.msra.mxu0 0.0
    %1538 = vmatprep.subr.mxu0 0.0
    %1539 = vmatpush1.msra.mxu0 0.0
    %1540 = vmatprep.subr.mxu0 0.0
    %1541 = vmatpush1.msra.mxu0 0.0
    %1542 = vmatprep.subr.mxu0 0.0
    %1543 = vmatpush1.msra.mxu0 0.0
    %1544 = vmatprep.subr.mxu0 0.0
    %1545 = vmatpush1.msra.mxu0 0.0
    %1546 = vmatprep.subr.mxu0 0.0
    %1547 = vmatpush1.msra.mxu0 0.0
    %1548 = vmatprep.subr.mxu0 0.0
    %1549 = vmatpush1.msra.mxu0 0.0
    %1550 = vmatprep.subr.mxu0 0.0
    %1551 = vmatpush1.msra.mxu0 0.0
    %1552 = vmatprep.subr.mxu0 0.0
    %1553 = vmatpush1.msra.mxu0 0.0
    %1554 = vmatprep.subr.mxu0 0.0
    %1555 = vmatpush1.msra.mxu0 0.0
    %1556 = vmatprep.subr.mxu0 0.0
    %1557 = vmatpush1.msra.mxu0 0.0
    %1558 = vmatprep.subr.mxu0 0.0
    %1559 = vmatpush1.msra.mxu0 0.0
    %1560 = vmatprep.subr.mxu0 0.0
    %1561 = vmatpush1.msra.mxu0 %v1530
    %1562 = vmatprep.subr.mxu0 0.0
    %1563 = vmatpush1.msra.mxu0 %v1524
    %1564 = vmatprep.subr.mxu0 0.0
    %1565 = vmatpush2.msra.mxu0 0.0
    %1566 = vmatprep.subr.mxu0 0.0
    %1567 = vmatpush2.msra.mxu0 0.0
    %1568 = vmatprep.subr.mxu0 0.0
    %1569 = vmatpush2.msra.mxu0 0.0
    %1570 = vmatprep.subr.mxu0 0.0
    %1571 = vmatpush2.msra.mxu0 0.0
    %1572 = vmatprep.subr.mxu0 0.0
    %1573 = vmatpush2.msra.mxu0 0.0
    %1574 = vmatprep.subr.mxu0 0.0
    %1575 = vmatpush2.msra.mxu0 0.0
    %1576 = vmatprep.subr.mxu0 0.0
    %1577 = vmatpush2.msra.mxu0 0.0
    %1578 = vmatprep.subr.mxu0 0.0
    %1579 = vmatpush2.msra.mxu0 0.0
    %1580 = vmatprep.subr.mxu0 0.0
    %1581 = vmatpush2.msra.mxu0 0.0
    %1582 = vmatprep.subr.mxu0 0.0
    %1583 = vmatpush2.msra.mxu0 0.0
    %1584 = vmatprep.subr.mxu0 0.0
    %1585 = vmatpush2.msra.mxu0 0.0
    %1586 = vmatprep.subr.mxu0 0.0
    %1587 = vmatpush2.msra.mxu0 0.0
    %1588 = vmatprep.subr.mxu0 0.0
    %1589 = vmatpush2.msra.mxu0 0.0
    %1590 = vmatprep.subr.mxu0 0.0
    %1591 = vmatpush2.msra.mxu0 0.0
    %1592 = vmatprep.subr.mxu0 0.0
    %1593 = vmatpush2.msra.mxu0 0.0
    %1594 = vmatprep.subr.mxu0 0.0
    %1595 = vmatpush2.msra.mxu0 0.0
    %1596 = vmatprep.mubr.f32.mxu0 0.0
    %1597 = vmatmul.mubr.f32.gmra.mxu0 %v1527
    %v1598 = vpop.f32.mrf.mxu0
    %v1599 = vadd.f32 0.0, %v1598
    %v1600 = vpop.f32.mrf.mxu0
    %1601 = vdwg.mxu0
    %v1602 = vadd.f32 %v1356, %v1599
    %1603 = vst.msk [vmem:[#allocation2 + $0x8] sm:$0xff] %vm24, %v1602
    // Predicated region
    $region18: #{tpu_custom_call.1} parent=1 // pred_check
      _
    $region19: #{tpu_custom_call.1} parent=1 // pred_check_branch
      %1605 = sbr.rel (0) target = $region21
    $region20: #{tpu_custom_call.1} parent=1 // pred_region
      %s1607 = ssub.s32 256, 256
      %1608 = vsyncadd [#allocation3], %s1607
      %s1609 = sshll.u32 [#allocation2], 4
      %s1610 = int_to_ptr.vmem [resolvable:$true] %s1609
      %1615 = dma.vmem_to_hbm [thread:$0]  %s1610, 256, %s4, [#allocation3], 128, 128, 8
    $region21: #{tpu_custom_call.1} parent=1 // pred_fallthru
      _
    // Predicated region
    $region22: #{tpu_custom_call.1} parent=1 // pred_check
      _
    $region23: #{tpu_custom_call.1} parent=1 // pred_check_branch
      %1617 = sbr.rel (0) target = $region25
    $region24: #{tpu_custom_call.1} parent=1 // pred_region
      %1618 = dma.done [#allocation3], 256
    $region25: #{tpu_custom_call.1} parent=1 // pred_fallthru
      _
    %1619 = vsyncpa [#allocation3], 1

</llo_original>
